<compile_context>
chip_gen: v6e
topology: v6e:2x2x1
jax: 0.10.0
libtpu: 0.0.40
codegen_flags: <defaults>
</compile_context>

<pallas_src>
import jax
import jax.numpy as jnp
from jax import lax
from jax.experimental import pallas as pl
from jax.experimental.pallas import tpu as pltpu


def _vsq_kernel(x_ref, cb_ref, csq_ref, embed_ref, idx_ref):
    # x_ref:     (TB, T*D)  input rows, (token, dim) flattened into the lane axis
    # cb_ref:    (T, K, D)  full codebook, resident in VMEM across the grid
    # csq_ref:   (T, K)     precomputed ||c||^2 (f32), resident in VMEM
    # embed_ref: (TB, T*D)  quantized embeddings (same flattened layout)
    # idx_ref:   (TB, T)    selected code indices (int32)
    T, K, D = cb_ref.shape
    TB = x_ref.shape[0]

    # T (num_tokens) is small and static -> unrolled per-token 2-D matmuls;
    # only lane-dim slices / leading-dim indexing, no transposes or reshapes.
    for t in range(T):
        x_t = x_ref[:, pl.ds(t * D, D)].astype(jnp.float32)          # (TB, D)
        cb_t = cb_ref[t].astype(jnp.float32)                         # (K, D)
        csq_t = csq_ref[pl.ds(t, 1), :]                              # (1, K)

        # argmin_k ||x - c_k||^2 == argmin_k (-2 x.c_k + ||c_k||^2); the
        # ||x||^2 term is constant per row and dropped.  Contract the last
        # dims of both operands so no (K, D) -> (D, K) transpose is made.
        xc = lax.dot_general(x_t, cb_t, (((1,), (1,)), ((), ())),
                             preferred_element_type=jnp.float32)     # (TB, K)
        d = csq_t - 2.0 * xc                                         # (TB, K)

        # first-occurrence argmin over the vocab axis (matches torch.argmin)
        iota_k = lax.broadcasted_iota(jnp.int32, (TB, K), 1)
        min_d = jnp.min(d, axis=-1, keepdims=True)                   # (TB, 1)
        idx_t = jnp.min(jnp.where(d <= min_d, iota_k, K), axis=-1,
                        keepdims=True)                               # (TB, 1)

        # gather selected codes: one-hot @ codebook (MXU; 1.0/0.0 weights, so
        # rows reproduce the codebook entries to within f32 matmul emulation).
        one_hot = (iota_k == idx_t).astype(jnp.float32)              # (TB, K)
        emb_t = jnp.dot(one_hot, cb_t,
                        preferred_element_type=jnp.float32)          # (TB, D)

        embed_ref[:, pl.ds(t * D, D)] = emb_t.astype(embed_ref.dtype)
        idx_ref[:, pl.ds(t, 1)] = idx_t


def _round_up(n, m):
    return ((n + m - 1) // m) * m


def vsq_forward(x, codebook, *, block_b=1024):
    """x: (*batch, num_tokens, embed_dim); codebook: (num_tokens, vocab, embed_dim).

    Returns (embed, idxes) with embed: (*batch, T, D) in x.dtype, idxes: (*batch, T) int32.
    """
    *batch, T, D = x.shape
    T_cb, K, D_cb = codebook.shape
    assert (T_cb, D_cb) == (T, D)

    # Free, contiguous reshape: no HBM transpose anywhere in the wrapper.
    x_flat = x.reshape(-1, T * D)
    B = x_flat.shape[0]

    # Precompute ||c||^2 once (tiny (T, K) table, stays resident in VMEM).
    csq = jnp.sum(codebook.astype(jnp.float32) ** 2, axis=-1)        # (T, K)

    itemsize = jnp.dtype(x.dtype).itemsize
    resident_bytes = (codebook.size * jnp.dtype(codebook.dtype).itemsize
                      + csq.size * 4)

    def _tile_bytes(tb_):
        io_blk = tb_ * T * D * itemsize * 2 + tb_ * T * 4   # x + embed + idx
        return 2 * io_blk + resident_bytes                  # x2 double buffering

    # Batch tile: as large as a conservative cross-generation VMEM budget
    # allows (v5e default scoped 16 MiB, v7x physical 64 MiB).
    vmem_budget = 16 * 1024 * 1024
    tb = max(8, min(_round_up(block_b, 8), _round_up(B, 8)))
    while tb > 8 and _tile_bytes(tb) > vmem_budget:
        tb = max(8, _round_up(tb // 2, 8))

    Bp = _round_up(B, tb)
    if Bp != B:
        x_flat = jnp.pad(x_flat, ((0, Bp - B), (0, 0)))

    grid = (Bp // tb,)
    flops = 4 * Bp * T * K * D          # distance matmul + one-hot gather matmul
    bytes_accessed = (Bp * T * D * itemsize        # x
                      + resident_bytes             # codebook + ||c||^2
                      + Bp * T * D * itemsize      # embed
                      + Bp * T * 4)                # idx

    embed_flat, idx_flat = pl.pallas_call(
        _vsq_kernel,
        out_shape=(
            jax.ShapeDtypeStruct((Bp, T * D), x.dtype),
            jax.ShapeDtypeStruct((Bp, T), jnp.int32),
        ),
        grid=grid,
        in_specs=[
            pl.BlockSpec((tb, T * D), lambda b: (b, 0)),   # x batch tile
            pl.BlockSpec((T, K, D), lambda b: (0, 0, 0)),  # codebook: resident
            pl.BlockSpec((T, K), lambda b: (0, 0)),        # ||c||^2: resident
        ],
        out_specs=(
            pl.BlockSpec((tb, T * D), lambda b: (b, 0)),
            pl.BlockSpec((tb, T), lambda b: (b, 0)),
        ),
        compiler_params=pltpu.CompilerParams(
            dimension_semantics=("parallel",),
            vmem_limit_bytes=32 * 1024 * 1024,
        ),
        cost_estimate=pl.CostEstimate(
            flops=flops, transcendentals=0, bytes_accessed=bytes_accessed),
    )(x_flat, codebook, csq)

    embed = embed_flat[:B].reshape(*batch, T, D)
    idxes = idx_flat[:B].reshape(*batch, T)
    return embed, idxes


def ref_forward(x, codebook):
    """Pure-JAX reference mirroring the PyTorch forward."""
    *batch, T, D = x.shape
    x_flat = x.reshape(-1, T, D)
    x_ = jnp.moveaxis(x_flat, 1, 0)                               # (T, B, D)
    diff = x_[:, :, None, :] - codebook[:, None, :, :]            # (T, B, K, D)
    dists = jnp.sqrt(jnp.sum(diff * diff, axis=-1))               # (T, B, K)
    idx_ = jnp.argmin(dists, axis=-1)                             # (T, B)
    idx = jnp.moveaxis(idx_, 1, 0)                                # (B, T)
    emb = codebook[jnp.arange(T)[None, :], idx]                   # (B, T, D)
    return emb.reshape(*batch, T, D), idx.reshape(*batch, T)


if __name__ == "__main__":
    num_tokens, vocab_size, embed_dim = 8, 16, 32
    key = jax.random.PRNGKey(0)
    k_cb, k_x = jax.random.split(key)
    # Deterministic codebook init (module leaves it to kmeans on first train step).
    codebook = jax.random.normal(k_cb, (num_tokens, vocab_size, embed_dim),
                                 dtype=jnp.float32)
    x = jax.random.normal(k_x, (2, 3, num_tokens, embed_dim), dtype=jnp.float32)

    embed, idxes = vsq_forward(x, codebook)
    jax.block_until_ready((embed, idxes))

    emb_want, idx_want = ref_forward(x, codebook)
    assert embed.shape == (2, 3, num_tokens, embed_dim)
    assert idxes.shape == (2, 3, num_tokens)
    assert jnp.array_equal(idxes, idx_want.astype(idxes.dtype))
    assert jnp.allclose(embed, emb_want, atol=1e-5)
    print("KERNEL_OK")
</pallas_src>

<mosaic_0001>
module attributes {stable_mosaic.version = 11 : i64} {
  func.func @_vsq_kernel(%arg0: i32, %arg1: memref<8x256xf32, #tpu.memory_space<vmem>>, %arg2: memref<8x16x32xf32, #tpu.memory_space<vmem>>, %arg3: memref<8x16xf32, #tpu.memory_space<vmem>>, %arg4: memref<8x256xf32, #tpu.memory_space<vmem>>, %arg5: memref<8x8xi32, #tpu.memory_space<vmem>>) attributes {dimension_semantics = [#tpu.dimension_semantics<parallel>], iteration_bounds = array<i64: 1>, scalar_prefetch = 0 : i64, scratch_operands = 0 : i64, tpu.core_type = #tpu.core_type<tc>, window_params = [{transform_indices = @transform_0, window_bounds = array<i64: 8, 256>}, {pipeline_mode = #tpu.pipeline_mode<synchronous>, transform_indices = @transform_1, window_bounds = array<i64: 8, 16, 32>}, {pipeline_mode = #tpu.pipeline_mode<synchronous>, transform_indices = @transform_2, window_bounds = array<i64: 8, 16>}, {transform_indices = @transform_3, window_bounds = array<i64: 8, 256>}, {transform_indices = @transform_4, window_bounds = array<i64: 8, 8>}]} {
    %c0 = arith.constant 0 : index
    %c0_0 = arith.constant 0 : index
    %0 = vector.load %arg1[%c0, %c0_0] : memref<8x256xf32, #tpu.memory_space<vmem>>, vector<8x32xf32>
    %c0_1 = arith.constant 0 : index
    %c0_2 = arith.constant 0 : index
    %c0_3 = arith.constant 0 : index
    %1 = vector.load %arg2[%c0_1, %c0_2, %c0_3] : memref<8x16x32xf32, #tpu.memory_space<vmem>>, vector<1x16x32xf32>
    %2 = vector.shape_cast %1 : vector<1x16x32xf32> to vector<16x32xf32>
    %c0_4 = arith.constant 0 : index
    %c0_5 = arith.constant 0 : index
    %3 = vector.load %arg3[%c0_4, %c0_5] : memref<8x16xf32, #tpu.memory_space<vmem>>, vector<1x16xf32>
    %cst = arith.constant dense<0.000000e+00> : vector<8x16xf32>
    %4 = tpu.matmul %0, %2, %cst {dimension_numbers = #tpu.dot_dimension_numbers<[1], [1], [0], [0], [0, 0, 1, 0], [], []>} : vector<8x32xf32>, vector<16x32xf32>, vector<8x16xf32> -> vector<8x16xf32>
    %cst_6 = arith.constant 2.000000e+00 : f32
    %5 = vector.broadcast %cst_6 : f32 to vector<8x16xf32>
    %6 = arith.mulf %5, %4 : vector<8x16xf32>
    %7 = vector.broadcast %3 : vector<1x16xf32> to vector<8x16xf32>
    %8 = arith.subf %7, %6 : vector<8x16xf32>
    %9 = tpu.iota {dimensions = array<i32: 1>} : vector<8x16xi32>
    %cst_7 = arith.constant dense<0x7F800000> : vector<8xf32>
    %10 = vector.multi_reduction <minimumf>, %8, %cst_7 [1] : vector<8x16xf32> to vector<8xf32>
    %11 = vector.shape_cast %10 : vector<8xf32> to vector<8x1xf32>
    %12 = vector.broadcast %11 : vector<8x1xf32> to vector<8x16xf32>
    %13 = arith.cmpf ole, %8, %12 : vector<8x16xf32>
    %c16_i32 = arith.constant 16 : i32
    %14 = vector.broadcast %c16_i32 : i32 to vector<8x16xi32>
    %15 = arith.select %13, %9, %14 : vector<8x16xi1>, vector<8x16xi32>
    %cst_8 = arith.constant dense<2147483647> : vector<8xi32>
    %16 = vector.multi_reduction <minsi>, %15, %cst_8 [1] : vector<8x16xi32> to vector<8xi32>
    %17 = vector.shape_cast %16 : vector<8xi32> to vector<8x1xi32>
    %18 = vector.broadcast %17 : vector<8x1xi32> to vector<8x16xi32>
    %19 = arith.cmpi eq, %9, %18 : vector<8x16xi32>
    %20 = arith.extui %19 : vector<8x16xi1> to vector<8x16xi32>
    %21 = arith.sitofp %20 : vector<8x16xi32> to vector<8x16xf32>
    %cst_9 = arith.constant dense<0.000000e+00> : vector<8x32xf32>
    %22 = tpu.matmul %21, %2, %cst_9 {dimension_numbers = #tpu.dot_dimension_numbers<[1], [0], [0], [1], [0, 0, 1, 1], [], []>} : vector<8x16xf32>, vector<16x32xf32>, vector<8x32xf32> -> vector<8x32xf32>
    %c0_10 = arith.constant 0 : index
    %c0_11 = arith.constant 0 : index
    %23 = vector.load %arg4[%c0_10, %c0_11] : memref<8x256xf32, #tpu.memory_space<vmem>>, vector<8x32xf32>
    tpu.vector_store %arg4[%c0_10, %c0_11], %22 {strides = array<i32>} : memref<8x256xf32, #tpu.memory_space<vmem>>, vector<8x32xf32>,
    %c0_12 = arith.constant 0 : index
    %c0_13 = arith.constant 0 : index
    %24 = vector.load %arg5[%c0_12, %c0_13] : memref<8x8xi32, #tpu.memory_space<vmem>>, vector<8x1xi32>
    tpu.vector_store %arg5[%c0_12, %c0_13], %17 {strides = array<i32>} : memref<8x8xi32, #tpu.memory_space<vmem>>, vector<8x1xi32>,
    %c0_14 = arith.constant 0 : index
    %c32 = arith.constant 32 : index
    %25 = vector.load %arg1[%c0_14, %c32] : memref<8x256xf32, #tpu.memory_space<vmem>>, vector<8x32xf32>
    %c1 = arith.constant 1 : index
    %c0_15 = arith.constant 0 : index
    %c0_16 = arith.constant 0 : index
    %26 = vector.load %arg2[%c1, %c0_15, %c0_16] : memref<8x16x32xf32, #tpu.memory_space<vmem>>, vector<1x16x32xf32>
    %27 = vector.shape_cast %26 : vector<1x16x32xf32> to vector<16x32xf32>
    %c1_17 = arith.constant 1 : index
    %c0_18 = arith.constant 0 : index
    %28 = vector.load %arg3[%c1_17, %c0_18] : memref<8x16xf32, #tpu.memory_space<vmem>>, vector<1x16xf32>
    %cst_19 = arith.constant dense<0.000000e+00> : vector<8x16xf32>
    %29 = tpu.matmul %25, %27, %cst_19 {dimension_numbers = #tpu.dot_dimension_numbers<[1], [1], [0], [0], [0, 0, 1, 0], [], []>} : vector<8x32xf32>, vector<16x32xf32>, vector<8x16xf32> -> vector<8x16xf32>
    %cst_20 = arith.constant 2.000000e+00 : f32
    %30 = vector.broadcast %cst_20 : f32 to vector<8x16xf32>
    %31 = arith.mulf %30, %29 : vector<8x16xf32>
    %32 = vector.broadcast %28 : vector<1x16xf32> to vector<8x16xf32>
    %33 = arith.subf %32, %31 : vector<8x16xf32>
    %34 = tpu.iota {dimensions = array<i32: 1>} : vector<8x16xi32>
    %cst_21 = arith.constant dense<0x7F800000> : vector<8xf32>
    %35 = vector.multi_reduction <minimumf>, %33, %cst_21 [1] : vector<8x16xf32> to vector<8xf32>
    %36 = vector.shape_cast %35 : vector<8xf32> to vector<8x1xf32>
    %37 = vector.broadcast %36 : vector<8x1xf32> to vector<8x16xf32>
    %38 = arith.cmpf ole, %33, %37 : vector<8x16xf32>
    %c16_i32_22 = arith.constant 16 : i32
    %39 = vector.broadcast %c16_i32_22 : i32 to vector<8x16xi32>
    %40 = arith.select %38, %34, %39 : vector<8x16xi1>, vector<8x16xi32>
    %cst_23 = arith.constant dense<2147483647> : vector<8xi32>
    %41 = vector.multi_reduction <minsi>, %40, %cst_23 [1] : vector<8x16xi32> to vector<8xi32>
    %42 = vector.shape_cast %41 : vector<8xi32> to vector<8x1xi32>
    %43 = vector.broadcast %42 : vector<8x1xi32> to vector<8x16xi32>
    %44 = arith.cmpi eq, %34, %43 : vector<8x16xi32>
    %45 = arith.extui %44 : vector<8x16xi1> to vector<8x16xi32>
    %46 = arith.sitofp %45 : vector<8x16xi32> to vector<8x16xf32>
    %cst_24 = arith.constant dense<0.000000e+00> : vector<8x32xf32>
    %47 = tpu.matmul %46, %27, %cst_24 {dimension_numbers = #tpu.dot_dimension_numbers<[1], [0], [0], [1], [0, 0, 1, 1], [], []>} : vector<8x16xf32>, vector<16x32xf32>, vector<8x32xf32> -> vector<8x32xf32>
    %c0_25 = arith.constant 0 : index
    %c32_26 = arith.constant 32 : index
    %48 = vector.load %arg4[%c0_25, %c32_26] : memref<8x256xf32, #tpu.memory_space<vmem>>, vector<8x32xf32>
    tpu.vector_store %arg4[%c0_25, %c32_26], %47 {strides = array<i32>} : memref<8x256xf32, #tpu.memory_space<vmem>>, vector<8x32xf32>,
    %c0_27 = arith.constant 0 : index
    %c1_28 = arith.constant 1 : index
    %49 = vector.load %arg5[%c0_27, %c1_28] : memref<8x8xi32, #tpu.memory_space<vmem>>, vector<8x1xi32>
    tpu.vector_store %arg5[%c0_27, %c1_28], %42 {strides = array<i32>} : memref<8x8xi32, #tpu.memory_space<vmem>>, vector<8x1xi32>,
    %c0_29 = arith.constant 0 : index
    %c64 = arith.constant 64 : index
    %50 = vector.load %arg1[%c0_29, %c64] : memref<8x256xf32, #tpu.memory_space<vmem>>, vector<8x32xf32>
    %c2 = arith.constant 2 : index
    %c0_30 = arith.constant 0 : index
    %c0_31 = arith.constant 0 : index
    %51 = vector.load %arg2[%c2, %c0_30, %c0_31] : memref<8x16x32xf32, #tpu.memory_space<vmem>>, vector<1x16x32xf32>
    %52 = vector.shape_cast %51 : vector<1x16x32xf32> to vector<16x32xf32>
    %c2_32 = arith.constant 2 : index
    %c0_33 = arith.constant 0 : index
    %53 = vector.load %arg3[%c2_32, %c0_33] : memref<8x16xf32, #tpu.memory_space<vmem>>, vector<1x16xf32>
    %cst_34 = arith.constant dense<0.000000e+00> : vector<8x16xf32>
    %54 = tpu.matmul %50, %52, %cst_34 {dimension_numbers = #tpu.dot_dimension_numbers<[1], [1], [0], [0], [0, 0, 1, 0], [], []>} : vector<8x32xf32>, vector<16x32xf32>, vector<8x16xf32> -> vector<8x16xf32>
    %cst_35 = arith.constant 2.000000e+00 : f32
    %55 = vector.broadcast %cst_35 : f32 to vector<8x16xf32>
    %56 = arith.mulf %55, %54 : vector<8x16xf32>
    %57 = vector.broadcast %53 : vector<1x16xf32> to vector<8x16xf32>
    %58 = arith.subf %57, %56 : vector<8x16xf32>
    %59 = tpu.iota {dimensions = array<i32: 1>} : vector<8x16xi32>
    %cst_36 = arith.constant dense<0x7F800000> : vector<8xf32>
    %60 = vector.multi_reduction <minimumf>, %58, %cst_36 [1] : vector<8x16xf32> to vector<8xf32>
    %61 = vector.shape_cast %60 : vector<8xf32> to vector<8x1xf32>
    %62 = vector.broadcast %61 : vector<8x1xf32> to vector<8x16xf32>
    %63 = arith.cmpf ole, %58, %62 : vector<8x16xf32>
    %c16_i32_37 = arith.constant 16 : i32
    %64 = vector.broadcast %c16_i32_37 : i32 to vector<8x16xi32>
    %65 = arith.select %63, %59, %64 : vector<8x16xi1>, vector<8x16xi32>
    %cst_38 = arith.constant dense<2147483647> : vector<8xi32>
    %66 = vector.multi_reduction <minsi>, %65, %cst_38 [1] : vector<8x16xi32> to vector<8xi32>
    %67 = vector.shape_cast %66 : vector<8xi32> to vector<8x1xi32>
    %68 = vector.broadcast %67 : vector<8x1xi32> to vector<8x16xi32>
    %69 = arith.cmpi eq, %59, %68 : vector<8x16xi32>
    %70 = arith.extui %69 : vector<8x16xi1> to vector<8x16xi32>
    %71 = arith.sitofp %70 : vector<8x16xi32> to vector<8x16xf32>
    %cst_39 = arith.constant dense<0.000000e+00> : vector<8x32xf32>
    %72 = tpu.matmul %71, %52, %cst_39 {dimension_numbers = #tpu.dot_dimension_numbers<[1], [0], [0], [1], [0, 0, 1, 1], [], []>} : vector<8x16xf32>, vector<16x32xf32>, vector<8x32xf32> -> vector<8x32xf32>
    %c0_40 = arith.constant 0 : index
    %c64_41 = arith.constant 64 : index
    %73 = vector.load %arg4[%c0_40, %c64_41] : memref<8x256xf32, #tpu.memory_space<vmem>>, vector<8x32xf32>
    tpu.vector_store %arg4[%c0_40, %c64_41], %72 {strides = array<i32>} : memref<8x256xf32, #tpu.memory_space<vmem>>, vector<8x32xf32>,
    %c0_42 = arith.constant 0 : index
    %c2_43 = arith.constant 2 : index
    %74 = vector.load %arg5[%c0_42, %c2_43] : memref<8x8xi32, #tpu.memory_space<vmem>>, vector<8x1xi32>
    tpu.vector_store %arg5[%c0_42, %c2_43], %67 {strides = array<i32>} : memref<8x8xi32, #tpu.memory_space<vmem>>, vector<8x1xi32>,
    %c0_44 = arith.constant 0 : index
    %c96 = arith.constant 96 : index
    %75 = vector.load %arg1[%c0_44, %c96] : memref<8x256xf32, #tpu.memory_space<vmem>>, vector<8x32xf32>
    %c3 = arith.constant 3 : index
    %c0_45 = arith.constant 0 : index
    %c0_46 = arith.constant 0 : index
    %76 = vector.load %arg2[%c3, %c0_45, %c0_46] : memref<8x16x32xf32, #tpu.memory_space<vmem>>, vector<1x16x32xf32>
    %77 = vector.shape_cast %76 : vector<1x16x32xf32> to vector<16x32xf32>
    %c3_47 = arith.constant 3 : index
    %c0_48 = arith.constant 0 : index
    %78 = vector.load %arg3[%c3_47, %c0_48] : memref<8x16xf32, #tpu.memory_space<vmem>>, vector<1x16xf32>
    %cst_49 = arith.constant dense<0.000000e+00> : vector<8x16xf32>
    %79 = tpu.matmul %75, %77, %cst_49 {dimension_numbers = #tpu.dot_dimension_numbers<[1], [1], [0], [0], [0, 0, 1, 0], [], []>} : vector<8x32xf32>, vector<16x32xf32>, vector<8x16xf32> -> vector<8x16xf32>
    %cst_50 = arith.constant 2.000000e+00 : f32
    %80 = vector.broadcast %cst_50 : f32 to vector<8x16xf32>
    %81 = arith.mulf %80, %79 : vector<8x16xf32>
    %82 = vector.broadcast %78 : vector<1x16xf32> to vector<8x16xf32>
    %83 = arith.subf %82, %81 : vector<8x16xf32>
    %84 = tpu.iota {dimensions = array<i32: 1>} : vector<8x16xi32>
    %cst_51 = arith.constant dense<0x7F800000> : vector<8xf32>
    %85 = vector.multi_reduction <minimumf>, %83, %cst_51 [1] : vector<8x16xf32> to vector<8xf32>
    %86 = vector.shape_cast %85 : vector<8xf32> to vector<8x1xf32>
    %87 = vector.broadcast %86 : vector<8x1xf32> to vector<8x16xf32>
    %88 = arith.cmpf ole, %83, %87 : vector<8x16xf32>
    %c16_i32_52 = arith.constant 16 : i32
    %89 = vector.broadcast %c16_i32_52 : i32 to vector<8x16xi32>
    %90 = arith.select %88, %84, %89 : vector<8x16xi1>, vector<8x16xi32>
    %cst_53 = arith.constant dense<2147483647> : vector<8xi32>
    %91 = vector.multi_reduction <minsi>, %90, %cst_53 [1] : vector<8x16xi32> to vector<8xi32>
    %92 = vector.shape_cast %91 : vector<8xi32> to vector<8x1xi32>
    %93 = vector.broadcast %92 : vector<8x1xi32> to vector<8x16xi32>
    %94 = arith.cmpi eq, %84, %93 : vector<8x16xi32>
    %95 = arith.extui %94 : vector<8x16xi1> to vector<8x16xi32>
    %96 = arith.sitofp %95 : vector<8x16xi32> to vector<8x16xf32>
    %cst_54 = arith.constant dense<0.000000e+00> : vector<8x32xf32>
    %97 = tpu.matmul %96, %77, %cst_54 {dimension_numbers = #tpu.dot_dimension_numbers<[1], [0], [0], [1], [0, 0, 1, 1], [], []>} : vector<8x16xf32>, vector<16x32xf32>, vector<8x32xf32> -> vector<8x32xf32>
    %c0_55 = arith.constant 0 : index
    %c96_56 = arith.constant 96 : index
    %98 = vector.load %arg4[%c0_55, %c96_56] : memref<8x256xf32, #tpu.memory_space<vmem>>, vector<8x32xf32>
    tpu.vector_store %arg4[%c0_55, %c96_56], %97 {strides = array<i32>} : memref<8x256xf32, #tpu.memory_space<vmem>>, vector<8x32xf32>,
    %c0_57 = arith.constant 0 : index
    %c3_58 = arith.constant 3 : index
    %99 = vector.load %arg5[%c0_57, %c3_58] : memref<8x8xi32, #tpu.memory_space<vmem>>, vector<8x1xi32>
    tpu.vector_store %arg5[%c0_57, %c3_58], %92 {strides = array<i32>} : memref<8x8xi32, #tpu.memory_space<vmem>>, vector<8x1xi32>,
    %c0_59 = arith.constant 0 : index
    %c128 = arith.constant 128 : index
    %100 = vector.load %arg1[%c0_59, %c128] : memref<8x256xf32, #tpu.memory_space<vmem>>, vector<8x32xf32>
    %c4 = arith.constant 4 : index
    %c0_60 = arith.constant 0 : index
    %c0_61 = arith.constant 0 : index
    %101 = vector.load %arg2[%c4, %c0_60, %c0_61] : memref<8x16x32xf32, #tpu.memory_space<vmem>>, vector<1x16x32xf32>
    %102 = vector.shape_cast %101 : vector<1x16x32xf32> to vector<16x32xf32>
    %c4_62 = arith.constant 4 : index
    %c0_63 = arith.constant 0 : index
    %103 = vector.load %arg3[%c4_62, %c0_63] : memref<8x16xf32, #tpu.memory_space<vmem>>, vector<1x16xf32>
    %cst_64 = arith.constant dense<0.000000e+00> : vector<8x16xf32>
    %104 = tpu.matmul %100, %102, %cst_64 {dimension_numbers = #tpu.dot_dimension_numbers<[1], [1], [0], [0], [0, 0, 1, 0], [], []>} : vector<8x32xf32>, vector<16x32xf32>, vector<8x16xf32> -> vector<8x16xf32>
    %cst_65 = arith.constant 2.000000e+00 : f32
    %105 = vector.broadcast %cst_65 : f32 to vector<8x16xf32>
    %106 = arith.mulf %105, %104 : vector<8x16xf32>
    %107 = vector.broadcast %103 : vector<1x16xf32> to vector<8x16xf32>
    %108 = arith.subf %107, %106 : vector<8x16xf32>
    %109 = tpu.iota {dimensions = array<i32: 1>} : vector<8x16xi32>
    %cst_66 = arith.constant dense<0x7F800000> : vector<8xf32>
    %110 = vector.multi_reduction <minimumf>, %108, %cst_66 [1] : vector<8x16xf32> to vector<8xf32>
    %111 = vector.shape_cast %110 : vector<8xf32> to vector<8x1xf32>
    %112 = vector.broadcast %111 : vector<8x1xf32> to vector<8x16xf32>
    %113 = arith.cmpf ole, %108, %112 : vector<8x16xf32>
    %c16_i32_67 = arith.constant 16 : i32
    %114 = vector.broadcast %c16_i32_67 : i32 to vector<8x16xi32>
    %115 = arith.select %113, %109, %114 : vector<8x16xi1>, vector<8x16xi32>
    %cst_68 = arith.constant dense<2147483647> : vector<8xi32>
    %116 = vector.multi_reduction <minsi>, %115, %cst_68 [1] : vector<8x16xi32> to vector<8xi32>
    %117 = vector.shape_cast %116 : vector<8xi32> to vector<8x1xi32>
    %118 = vector.broadcast %117 : vector<8x1xi32> to vector<8x16xi32>
    %119 = arith.cmpi eq, %109, %118 : vector<8x16xi32>
    %120 = arith.extui %119 : vector<8x16xi1> to vector<8x16xi32>
    %121 = arith.sitofp %120 : vector<8x16xi32> to vector<8x16xf32>
    %cst_69 = arith.constant dense<0.000000e+00> : vector<8x32xf32>
    %122 = tpu.matmul %121, %102, %cst_69 {dimension_numbers = #tpu.dot_dimension_numbers<[1], [0], [0], [1], [0, 0, 1, 1], [], []>} : vector<8x16xf32>, vector<16x32xf32>, vector<8x32xf32> -> vector<8x32xf32>
    %c0_70 = arith.constant 0 : index
    %c128_71 = arith.constant 128 : index
    %123 = vector.load %arg4[%c0_70, %c128_71] : memref<8x256xf32, #tpu.memory_space<vmem>>, vector<8x32xf32>
    tpu.vector_store %arg4[%c0_70, %c128_71], %122 {strides = array<i32>} : memref<8x256xf32, #tpu.memory_space<vmem>>, vector<8x32xf32>,
    %c0_72 = arith.constant 0 : index
    %c4_73 = arith.constant 4 : index
    %124 = vector.load %arg5[%c0_72, %c4_73] : memref<8x8xi32, #tpu.memory_space<vmem>>, vector<8x1xi32>
    tpu.vector_store %arg5[%c0_72, %c4_73], %117 {strides = array<i32>} : memref<8x8xi32, #tpu.memory_space<vmem>>, vector<8x1xi32>,
    %c0_74 = arith.constant 0 : index
    %c160 = arith.constant 160 : index
    %125 = vector.load %arg1[%c0_74, %c160] : memref<8x256xf32, #tpu.memory_space<vmem>>, vector<8x32xf32>
    %c5 = arith.constant 5 : index
    %c0_75 = arith.constant 0 : index
    %c0_76 = arith.constant 0 : index
    %126 = vector.load %arg2[%c5, %c0_75, %c0_76] : memref<8x16x32xf32, #tpu.memory_space<vmem>>, vector<1x16x32xf32>
    %127 = vector.shape_cast %126 : vector<1x16x32xf32> to vector<16x32xf32>
    %c5_77 = arith.constant 5 : index
    %c0_78 = arith.constant 0 : index
    %128 = vector.load %arg3[%c5_77, %c0_78] : memref<8x16xf32, #tpu.memory_space<vmem>>, vector<1x16xf32>
    %cst_79 = arith.constant dense<0.000000e+00> : vector<8x16xf32>
    %129 = tpu.matmul %125, %127, %cst_79 {dimension_numbers = #tpu.dot_dimension_numbers<[1], [1], [0], [0], [0, 0, 1, 0], [], []>} : vector<8x32xf32>, vector<16x32xf32>, vector<8x16xf32> -> vector<8x16xf32>
    %cst_80 = arith.constant 2.000000e+00 : f32
    %130 = vector.broadcast %cst_80 : f32 to vector<8x16xf32>
    %131 = arith.mulf %130, %129 : vector<8x16xf32>
    %132 = vector.broadcast %128 : vector<1x16xf32> to vector<8x16xf32>
    %133 = arith.subf %132, %131 : vector<8x16xf32>
    %134 = tpu.iota {dimensions = array<i32: 1>} : vector<8x16xi32>
    %cst_81 = arith.constant dense<0x7F800000> : vector<8xf32>
    %135 = vector.multi_reduction <minimumf>, %133, %cst_81 [1] : vector<8x16xf32> to vector<8xf32>
    %136 = vector.shape_cast %135 : vector<8xf32> to vector<8x1xf32>
    %137 = vector.broadcast %136 : vector<8x1xf32> to vector<8x16xf32>
    %138 = arith.cmpf ole, %133, %137 : vector<8x16xf32>
    %c16_i32_82 = arith.constant 16 : i32
    %139 = vector.broadcast %c16_i32_82 : i32 to vector<8x16xi32>
    %140 = arith.select %138, %134, %139 : vector<8x16xi1>, vector<8x16xi32>
    %cst_83 = arith.constant dense<2147483647> : vector<8xi32>
    %141 = vector.multi_reduction <minsi>, %140, %cst_83 [1] : vector<8x16xi32> to vector<8xi32>
    %142 = vector.shape_cast %141 : vector<8xi32> to vector<8x1xi32>
    %143 = vector.broadcast %142 : vector<8x1xi32> to vector<8x16xi32>
    %144 = arith.cmpi eq, %134, %143 : vector<8x16xi32>
    %145 = arith.extui %144 : vector<8x16xi1> to vector<8x16xi32>
    %146 = arith.sitofp %145 : vector<8x16xi32> to vector<8x16xf32>
    %cst_84 = arith.constant dense<0.000000e+00> : vector<8x32xf32>
    %147 = tpu.matmul %146, %127, %cst_84 {dimension_numbers = #tpu.dot_dimension_numbers<[1], [0], [0], [1], [0, 0, 1, 1], [], []>} : vector<8x16xf32>, vector<16x32xf32>, vector<8x32xf32> -> vector<8x32xf32>
    %c0_85 = arith.constant 0 : index
    %c160_86 = arith.constant 160 : index
    %148 = vector.load %arg4[%c0_85, %c160_86] : memref<8x256xf32, #tpu.memory_space<vmem>>, vector<8x32xf32>
    tpu.vector_store %arg4[%c0_85, %c160_86], %147 {strides = array<i32>} : memref<8x256xf32, #tpu.memory_space<vmem>>, vector<8x32xf32>,
    %c0_87 = arith.constant 0 : index
    %c5_88 = arith.constant 5 : index
    %149 = vector.load %arg5[%c0_87, %c5_88] : memref<8x8xi32, #tpu.memory_space<vmem>>, vector<8x1xi32>
    tpu.vector_store %arg5[%c0_87, %c5_88], %142 {strides = array<i32>} : memref<8x8xi32, #tpu.memory_space<vmem>>, vector<8x1xi32>,
    %c0_89 = arith.constant 0 : index
    %c192 = arith.constant 192 : index
    %150 = vector.load %arg1[%c0_89, %c192] : memref<8x256xf32, #tpu.memory_space<vmem>>, vector<8x32xf32>
    %c6 = arith.constant 6 : index
    %c0_90 = arith.constant 0 : index
    %c0_91 = arith.constant 0 : index
    %151 = vector.load %arg2[%c6, %c0_90, %c0_91] : memref<8x16x32xf32, #tpu.memory_space<vmem>>, vector<1x16x32xf32>
    %152 = vector.shape_cast %151 : vector<1x16x32xf32> to vector<16x32xf32>
    %c6_92 = arith.constant 6 : index
    %c0_93 = arith.constant 0 : index
    %153 = vector.load %arg3[%c6_92, %c0_93] : memref<8x16xf32, #tpu.memory_space<vmem>>, vector<1x16xf32>
    %cst_94 = arith.constant dense<0.000000e+00> : vector<8x16xf32>
    %154 = tpu.matmul %150, %152, %cst_94 {dimension_numbers = #tpu.dot_dimension_numbers<[1], [1], [0], [0], [0, 0, 1, 0], [], []>} : vector<8x32xf32>, vector<16x32xf32>, vector<8x16xf32> -> vector<8x16xf32>
    %cst_95 = arith.constant 2.000000e+00 : f32
    %155 = vector.broadcast %cst_95 : f32 to vector<8x16xf32>
    %156 = arith.mulf %155, %154 : vector<8x16xf32>
    %157 = vector.broadcast %153 : vector<1x16xf32> to vector<8x16xf32>
    %158 = arith.subf %157, %156 : vector<8x16xf32>
    %159 = tpu.iota {dimensions = array<i32: 1>} : vector<8x16xi32>
    %cst_96 = arith.constant dense<0x7F800000> : vector<8xf32>
    %160 = vector.multi_reduction <minimumf>, %158, %cst_96 [1] : vector<8x16xf32> to vector<8xf32>
    %161 = vector.shape_cast %160 : vector<8xf32> to vector<8x1xf32>
    %162 = vector.broadcast %161 : vector<8x1xf32> to vector<8x16xf32>
    %163 = arith.cmpf ole, %158, %162 : vector<8x16xf32>
    %c16_i32_97 = arith.constant 16 : i32
    %164 = vector.broadcast %c16_i32_97 : i32 to vector<8x16xi32>
    %165 = arith.select %163, %159, %164 : vector<8x16xi1>, vector<8x16xi32>
    %cst_98 = arith.constant dense<2147483647> : vector<8xi32>
    %166 = vector.multi_reduction <minsi>, %165, %cst_98 [1] : vector<8x16xi32> to vector<8xi32>
    %167 = vector.shape_cast %166 : vector<8xi32> to vector<8x1xi32>
    %168 = vector.broadcast %167 : vector<8x1xi32> to vector<8x16xi32>
    %169 = arith.cmpi eq, %159, %168 : vector<8x16xi32>
    %170 = arith.extui %169 : vector<8x16xi1> to vector<8x16xi32>
    %171 = arith.sitofp %170 : vector<8x16xi32> to vector<8x16xf32>
    %cst_99 = arith.constant dense<0.000000e+00> : vector<8x32xf32>
    %172 = tpu.matmul %171, %152, %cst_99 {dimension_numbers = #tpu.dot_dimension_numbers<[1], [0], [0], [1], [0, 0, 1, 1], [], []>} : vector<8x16xf32>, vector<16x32xf32>, vector<8x32xf32> -> vector<8x32xf32>
    %c0_100 = arith.constant 0 : index
    %c192_101 = arith.constant 192 : index
    %173 = vector.load %arg4[%c0_100, %c192_101] : memref<8x256xf32, #tpu.memory_space<vmem>>, vector<8x32xf32>
    tpu.vector_store %arg4[%c0_100, %c192_101], %172 {strides = array<i32>} : memref<8x256xf32, #tpu.memory_space<vmem>>, vector<8x32xf32>,
    %c0_102 = arith.constant 0 : index
    %c6_103 = arith.constant 6 : index
    %174 = vector.load %arg5[%c0_102, %c6_103] : memref<8x8xi32, #tpu.memory_space<vmem>>, vector<8x1xi32>
    tpu.vector_store %arg5[%c0_102, %c6_103], %167 {strides = array<i32>} : memref<8x8xi32, #tpu.memory_space<vmem>>, vector<8x1xi32>,
    %c0_104 = arith.constant 0 : index
    %c224 = arith.constant 224 : index
    %175 = vector.load %arg1[%c0_104, %c224] : memref<8x256xf32, #tpu.memory_space<vmem>>, vector<8x32xf32>
    %c7 = arith.constant 7 : index
    %c0_105 = arith.constant 0 : index
    %c0_106 = arith.constant 0 : index
    %176 = vector.load %arg2[%c7, %c0_105, %c0_106] : memref<8x16x32xf32, #tpu.memory_space<vmem>>, vector<1x16x32xf32>
    %177 = vector.shape_cast %176 : vector<1x16x32xf32> to vector<16x32xf32>
    %c7_107 = arith.constant 7 : index
    %c0_108 = arith.constant 0 : index
    %178 = vector.load %arg3[%c7_107, %c0_108] : memref<8x16xf32, #tpu.memory_space<vmem>>, vector<1x16xf32>
    %cst_109 = arith.constant dense<0.000000e+00> : vector<8x16xf32>
    %179 = tpu.matmul %175, %177, %cst_109 {dimension_numbers = #tpu.dot_dimension_numbers<[1], [1], [0], [0], [0, 0, 1, 0], [], []>} : vector<8x32xf32>, vector<16x32xf32>, vector<8x16xf32> -> vector<8x16xf32>
    %cst_110 = arith.constant 2.000000e+00 : f32
    %180 = vector.broadcast %cst_110 : f32 to vector<8x16xf32>
    %181 = arith.mulf %180, %179 : vector<8x16xf32>
    %182 = vector.broadcast %178 : vector<1x16xf32> to vector<8x16xf32>
    %183 = arith.subf %182, %181 : vector<8x16xf32>
    %184 = tpu.iota {dimensions = array<i32: 1>} : vector<8x16xi32>
    %cst_111 = arith.constant dense<0x7F800000> : vector<8xf32>
    %185 = vector.multi_reduction <minimumf>, %183, %cst_111 [1] : vector<8x16xf32> to vector<8xf32>
    %186 = vector.shape_cast %185 : vector<8xf32> to vector<8x1xf32>
    %187 = vector.broadcast %186 : vector<8x1xf32> to vector<8x16xf32>
    %188 = arith.cmpf ole, %183, %187 : vector<8x16xf32>
    %c16_i32_112 = arith.constant 16 : i32
    %189 = vector.broadcast %c16_i32_112 : i32 to vector<8x16xi32>
    %190 = arith.select %188, %184, %189 : vector<8x16xi1>, vector<8x16xi32>
    %cst_113 = arith.constant dense<2147483647> : vector<8xi32>
    %191 = vector.multi_reduction <minsi>, %190, %cst_113 [1] : vector<8x16xi32> to vector<8xi32>
    %192 = vector.shape_cast %191 : vector<8xi32> to vector<8x1xi32>
    %193 = vector.broadcast %192 : vector<8x1xi32> to vector<8x16xi32>
    %194 = arith.cmpi eq, %184, %193 : vector<8x16xi32>
    %195 = arith.extui %194 : vector<8x16xi1> to vector<8x16xi32>
    %196 = arith.sitofp %195 : vector<8x16xi32> to vector<8x16xf32>
    %cst_114 = arith.constant dense<0.000000e+00> : vector<8x32xf32>
    %197 = tpu.matmul %196, %177, %cst_114 {dimension_numbers = #tpu.dot_dimension_numbers<[1], [0], [0], [1], [0, 0, 1, 1], [], []>} : vector<8x16xf32>, vector<16x32xf32>, vector<8x32xf32> -> vector<8x32xf32>
    %c0_115 = arith.constant 0 : index
    %c224_116 = arith.constant 224 : index
    %198 = vector.load %arg4[%c0_115, %c224_116] : memref<8x256xf32, #tpu.memory_space<vmem>>, vector<8x32xf32>
    tpu.vector_store %arg4[%c0_115, %c224_116], %197 {strides = array<i32>} : memref<8x256xf32, #tpu.memory_space<vmem>>, vector<8x32xf32>,
    %c0_117 = arith.constant 0 : index
    %c7_118 = arith.constant 7 : index
    %199 = vector.load %arg5[%c0_117, %c7_118] : memref<8x8xi32, #tpu.memory_space<vmem>>, vector<8x1xi32>
    tpu.vector_store %arg5[%c0_117, %c7_118], %192 {strides = array<i32>} : memref<8x8xi32, #tpu.memory_space<vmem>>, vector<8x1xi32>,
    return
  }
  func.func @transform_0(%arg0: i32) -> (i32, i32) {
    %c0_i32 = arith.constant 0 : i32
    %c0_i32_0 = arith.constant 0 : i32
    return %arg0, %c0_i32 : i32, i32
  }
  func.func @transform_1(%arg0: i32) -> (i32, i32, i32) {
    %c0_i32 = arith.constant 0 : i32
    %c0_i32_0 = arith.constant 0 : i32
    %c0_i32_1 = arith.constant 0 : i32
    %c0_i32_2 = arith.constant 0 : i32
    return %c0_i32, %c0_i32_0, %c0_i32_1 : i32, i32, i32
  }
  func.func @transform_2(%arg0: i32) -> (i32, i32) {
    %c0_i32 = arith.constant 0 : i32
    %c0_i32_0 = arith.constant 0 : i32
    %c0_i32_1 = arith.constant 0 : i32
    return %c0_i32, %c0_i32_0 : i32, i32
  }
  func.func @transform_3(%arg0: i32) -> (i32, i32) {
    %c0_i32 = arith.constant 0 : i32
    %c0_i32_0 = arith.constant 0 : i32
    return %arg0, %c0_i32 : i32, i32
  }
  func.func @transform_4(%arg0: i32) -> (i32, i32) {
    %c0_i32 = arith.constant 0 : i32
    %c0_i32_0 = arith.constant 0 : i32
    return %arg0, %c0_i32 : i32, i32
  }
}

</mosaic_0001>

<llo_original>
// kernel: tpu_custom_call.1
$region0: #{tpu_custom_call.1}
  #allocation0 [shape = 'u32[]', space=smem, size = 0x4, offset = 0x4, fixed_abs, tag = 'smem constant byte address 0x4 - core index']
  #allocation1 [shape = 'u32[144,128]{1,0:T(1,128)}', space=vmem, size = 0x12000, scoped, tag = 'internal scratch']
  %s0 = inlined_call_operand.hbm [shape: f32[8,256], index: 0, kind: input, shape index: {}]
  %s1 = inlined_call_operand.hbm [shape: f32[8,16,32], index: 1, kind: input, shape index: {}]
  %s2 = inlined_call_operand.hbm [shape: f32[8,16], index: 2, kind: input, shape index: {}]
  %s3 = inlined_call_operand.hbm [shape: f32[8,256], index: 3, kind: output, shape index: {0}]
  %s4 = inlined_call_operand.hbm [shape: s32[8,8], index: 4, kind: output, shape index: {1}]
  %5 = xla_tuple %s3, %s4
  %s6 = sld [smem:[#allocation0]]
  $region42: #{tpu_custom_call.1} parent=0
    _
  %s8 = ssub.s32 1, %s6
  %s9 = scalar_select 0, %s8, %s6
  $region1: #{tpu_custom_call.1} parent=0
    #allocation2 [shape = 'u8[8192]{0}', space=vmem, size = 0x2000, scoped, tag = 'input window, operand 0, single buffered']
    #allocation3 [shape = 's32[1]{0}', space=sflag, size = 0x4, scoped, tag = 'scoped memory for tpu_custom_call.1']
    #allocation4 [shape = 's32[1]{0}', space=sflag, size = 0x4, scoped, tag = 'scoped memory for tpu_custom_call.1']
    #allocation5 [shape = 'u8[65536]{0}', space=vmem, size = 0x10000, scoped, tag = 'input window, operand 1, single buffered']
    #allocation6 [shape = 's32[1]{0}', space=sflag, size = 0x4, scoped, tag = 'scoped memory for tpu_custom_call.1']
    #allocation7 [shape = 'u8[4096]{0}', space=vmem, size = 0x1000, scoped, tag = 'input window, operand 2, single buffered']
    #allocation8 [shape = 'u8[8192]{0}', space=vmem, size = 0x2000, scoped, tag = 'output window, operand 0, single buffered']
    #allocation9 [shape = 'u8[4096]{0}', space=vmem, size = 0x1000, scoped, tag = 'output window, operand 1, single buffered']
    #allocation10 [shape = 's32[1]{0}', space=sflag, size = 0x4, scoped, tag = 'scoped memory for tpu_custom_call.1']
    %10 = vsyncpa [#allocation3], 0
    %11 = vsyncpa [#allocation6], 0
    %12 = vsyncpa [#allocation4], 0
    %13 = vsyncpa [#allocation10], 0
    // Predicated region
    $region2: #{tpu_custom_call.1} parent=1 // pred_check
      _
    $region3: #{tpu_custom_call.1} parent=1 // pred_check_branch
      %15 = sbr.rel (0) target = $region5
    $region4: #{tpu_custom_call.1} parent=1 // pred_region
      %s17 = ssub.s32 256, 256
      %18 = vsyncadd [#allocation3], %s17
      %s20 = sshll.u32 [#allocation2], 4
      %s21 = int_to_ptr.vmem [resolvable:$true] %s20
      %23 = dma.hbm_to_vmem [thread:$0]  %s0, 256, %s21, [#allocation3]
    $region5: #{tpu_custom_call.1} parent=1 // pred_fallthru
      _
    // Predicated region
    $region6: #{tpu_custom_call.1} parent=1 // pred_check
      _
    $region7: #{tpu_custom_call.1} parent=1 // pred_check_branch
      %25 = sbr.rel (0) target = $region9
    $region8: #{tpu_custom_call.1} parent=1 // pred_region
      %s27 = ssub.s32 2048, 2048
      %28 = vsyncadd [#allocation6], %s27
      %s29 = sshll.u32 [#allocation5], 4
      %s30 = int_to_ptr.vmem [resolvable:$true] %s29
      %35 = dma.hbm_to_vmem [thread:$0]  %s1, 2048, %s30, [#allocation6], 128, 128, 8
    $region9: #{tpu_custom_call.1} parent=1 // pred_fallthru
      _
    // Predicated region
    $region10: #{tpu_custom_call.1} parent=1 // pred_check
      _
    $region11: #{tpu_custom_call.1} parent=1 // pred_check_branch
      %37 = sbr.rel (0) target = $region13
    $region12: #{tpu_custom_call.1} parent=1 // pred_region
      %s39 = ssub.s32 128, 128
      %40 = vsyncadd [#allocation6], %s39
      %s42 = sshll.u32 [#allocation7], 4
      %s43 = int_to_ptr.vmem [resolvable:$true] %s42
      %45 = dma.hbm_to_vmem [thread:$0]  %s2, 128, %s43, [#allocation6]
    $region13: #{tpu_custom_call.1} parent=1 // pred_fallthru
      _
    // Predicated region
    $region14: #{tpu_custom_call.1} parent=1 // pred_check
      _
    $region15: #{tpu_custom_call.1} parent=1 // pred_check_branch
      %47 = sbr.rel (0) target = $region17
    $region16: #{tpu_custom_call.1} parent=1 // pred_region
      %48 = dma.done [#allocation3], 256
    $region17: #{tpu_custom_call.1} parent=1 // pred_fallthru
      _
    // Predicated region
    $region18: #{tpu_custom_call.1} parent=1 // pred_check
      _
    $region19: #{tpu_custom_call.1} parent=1 // pred_check_branch
      %50 = sbr.rel (0) target = $region21
    $region20: #{tpu_custom_call.1} parent=1 // pred_region
      %51 = dma.done [#allocation6], 2048
    $region21: #{tpu_custom_call.1} parent=1 // pred_fallthru
      _
    // Predicated region
    $region22: #{tpu_custom_call.1} parent=1 // pred_check
      _
    $region23: #{tpu_custom_call.1} parent=1 // pred_check_branch
      %53 = sbr.rel (0) target = $region25
    $region24: #{tpu_custom_call.1} parent=1 // pred_region
      %54 = dma.done [#allocation6], 128
    $region25: #{tpu_custom_call.1} parent=1 // pred_fallthru
      _
    %v55 = vld [vmem:[#allocation2] sm:$0xff]
    %v56 = vld [vmem:[#allocation5] sm:$0xff]
    %v57 = vld [vmem:[#allocation5 + $0x8] sm:$0xff]
    %v58 = vld [vmem:[#allocation7] sm:$0x1]
    %vm59 = vcmask 261120
    %v61 = vsel %vm59, %v55, 0
    %v64 = vsel %vm59, %v56, 0
    %v67 = vsel %vm59, %v57, 0
    %69 = vmatprep.subr.mxu0 0.0
    %70 = vmatpush1.xpose.msra.mxu0 0.0
    %71 = vmatprep.subr.mxu0 0.0
    %72 = vmatpush1.xpose.msra.mxu0 0.0
    %73 = vmatprep.subr.mxu0 0.0
    %74 = vmatpush1.xpose.msra.mxu0 0.0
    %75 = vmatprep.subr.mxu0 0.0
    %76 = vmatpush1.xpose.msra.mxu0 0.0
    %77 = vmatprep.subr.mxu0 0.0
    %78 = vmatpush1.xpose.msra.mxu0 0.0
    %79 = vmatprep.subr.mxu0 0.0
    %80 = vmatpush1.xpose.msra.mxu0 0.0
    %81 = vmatprep.subr.mxu0 0.0
    %82 = vmatpush1.xpose.msra.mxu0 0.0
    %83 = vmatprep.subr.mxu0 0.0
    %84 = vmatpush1.xpose.msra.mxu0 0.0
    %85 = vmatprep.subr.mxu0 0.0
    %86 = vmatpush1.xpose.msra.mxu0 0.0
    %87 = vmatprep.subr.mxu0 0.0
    %88 = vmatpush1.xpose.msra.mxu0 0.0
    %89 = vmatprep.subr.mxu0 0.0
    %90 = vmatpush1.xpose.msra.mxu0 0.0
    %91 = vmatprep.subr.mxu0 0.0
    %92 = vmatpush1.xpose.msra.mxu0 0.0
    %93 = vmatprep.subr.mxu0 0.0
    %94 = vmatpush1.xpose.msra.mxu0 0.0
    %95 = vmatprep.subr.mxu0 0.0
    %96 = vmatpush1.xpose.msra.mxu0 0.0
    %97 = vmatprep.subr.mxu0 0.0
    %98 = vmatpush1.xpose.msra.mxu0 %v67
    %99 = vmatprep.subr.mxu0 0.0
    %100 = vmatpush1.xpose.msra.mxu0 %v64
    %101 = vmatprep.subr.mxu0 0.0
    %102 = vmatpush2.xpose.msra.mxu0 0.0
    %103 = vmatprep.subr.mxu0 0.0
    %104 = vmatpush2.xpose.msra.mxu0 0.0
    %105 = vmatprep.subr.mxu0 0.0
    %106 = vmatpush2.xpose.msra.mxu0 0.0
    %107 = vmatprep.subr.mxu0 0.0
    %108 = vmatpush2.xpose.msra.mxu0 0.0
    %109 = vmatprep.subr.mxu0 0.0
    %110 = vmatpush2.xpose.msra.mxu0 0.0
    %111 = vmatprep.subr.mxu0 0.0
    %112 = vmatpush2.xpose.msra.mxu0 0.0
    %113 = vmatprep.subr.mxu0 0.0
    %114 = vmatpush2.xpose.msra.mxu0 0.0
    %115 = vmatprep.subr.mxu0 0.0
    %116 = vmatpush2.xpose.msra.mxu0 0.0
    %117 = vmatprep.subr.mxu0 0.0
    %118 = vmatpush2.xpose.msra.mxu0 0.0
    %119 = vmatprep.subr.mxu0 0.0
    %120 = vmatpush2.xpose.msra.mxu0 0.0
    %121 = vmatprep.subr.mxu0 0.0
    %122 = vmatpush2.xpose.msra.mxu0 0.0
    %123 = vmatprep.subr.mxu0 0.0
    %124 = vmatpush2.xpose.msra.mxu0 0.0
    %125 = vmatprep.subr.mxu0 0.0
    %126 = vmatpush2.xpose.msra.mxu0 0.0
    %127 = vmatprep.subr.mxu0 0.0
    %128 = vmatpush2.xpose.msra.mxu0 0.0
    %129 = vmatprep.subr.mxu0 0.0
    %130 = vmatpush2.xpose.msra.mxu0 0.0
    %131 = vmatprep.subr.mxu0 0.0
    %132 = vmatpush2.xpose.msra.mxu0 0.0
    %133 = vmatprep.mubr.f32.mxu0 0.0
    %134 = vmatmul.mubr.f32.gmra.mxu0 %v61
    %v135 = vpop.f32.mrf.mxu0
    %v136 = vadd.f32 0.0, %v135
    %v137 = vpop.f32.mrf.mxu0
    %138 = vdwg.mxu0
    %v139 = vmul.f32 %v136, 2.0
    %v140 = vlaneseq
    %v141 = vshrl.u32 %v140, 7
    %v142 = vsub.s32 0, %v141
    %v143 = vrot.slane %v58, %v142
    %v144 = vsub.f32 %v143, %v139
    %v145 = vlaneseq
    %v146 = vand.u32 %v145, 127
    %vm147 = vcmask 130048
    %v148 = vsel %vm147, %v144, inf
    %149 = vmin.xlane.f32.xlu0 %v148
    %v150 = vpop.xlane.xlu0 %149
    %vm151 = vcmp.le.f32.partialorder %v144, %v150
    %v152 = vsel %vm151, %v146, 16
    %v153 = vsel %vm147, %v152, 2147483647
    %v154 = vand.u32 %v153, 65535
    %v155 = vshra.s32 %v153, 16
    %v156 = vcvt.s32.f32 %v154
    %v157 = vcvt.s32.f32 %v155
    %158 = vmin.xlane.f32.xlu0 %v157
    %v159 = vpop.xlane.xlu0 %158
    %vm160 = vcmp.eq.f32.partialorder %v157, %v159
    %v161 = vsel %vm160, %v156, inf
    %162 = vmin.xlane.f32.xlu0 %v161
    %v163 = vpop.xlane.xlu0 %162
    %v164 = vcvt.f32.s32 %v163
    %v165 = vcvt.f32.s32 %v159
    %v166 = vshll.u32 %v165, 16
    %v167 = vadd.s32 %v166, %v164
    %vm168 = vcmp.eq.s32.totalorder %v146, %v167
    %v169 = vsel %vm168, 1, 0
    %v170 = vcvt.s32.f32 %v169
    %v172 = vsel %vm147, %v170, 0
    %174 = vmatprep.subr.mxu0 0.0
    %175 = vmatpush1.msra.mxu0 0.0
    %176 = vmatprep.subr.mxu0 0.0
    %177 = vmatpush1.msra.mxu0 0.0
    %178 = vmatprep.subr.mxu0 0.0
    %179 = vmatpush1.msra.mxu0 0.0
    %180 = vmatprep.subr.mxu0 0.0
    %181 = vmatpush1.msra.mxu0 0.0
    %182 = vmatprep.subr.mxu0 0.0
    %183 = vmatpush1.msra.mxu0 0.0
    %184 = vmatprep.subr.mxu0 0.0
    %185 = vmatpush1.msra.mxu0 0.0
    %186 = vmatprep.subr.mxu0 0.0
    %187 = vmatpush1.msra.mxu0 0.0
    %188 = vmatprep.subr.mxu0 0.0
    %189 = vmatpush1.msra.mxu0 0.0
    %190 = vmatprep.subr.mxu0 0.0
    %191 = vmatpush1.msra.mxu0 0.0
    %192 = vmatprep.subr.mxu0 0.0
    %193 = vmatpush1.msra.mxu0 0.0
    %194 = vmatprep.subr.mxu0 0.0
    %195 = vmatpush1.msra.mxu0 0.0
    %196 = vmatprep.subr.mxu0 0.0
    %197 = vmatpush1.msra.mxu0 0.0
    %198 = vmatprep.subr.mxu0 0.0
    %199 = vmatpush1.msra.mxu0 0.0
    %200 = vmatprep.subr.mxu0 0.0
    %201 = vmatpush1.msra.mxu0 0.0
    %202 = vmatprep.subr.mxu0 0.0
    %203 = vmatpush1.msra.mxu0 %v57
    %204 = vmatprep.subr.mxu0 0.0
    %205 = vmatpush1.msra.mxu0 %v56
    %206 = vmatprep.subr.mxu0 0.0
    %207 = vmatpush2.msra.mxu0 0.0
    %208 = vmatprep.subr.mxu0 0.0
    %209 = vmatpush2.msra.mxu0 0.0
    %210 = vmatprep.subr.mxu0 0.0
    %211 = vmatpush2.msra.mxu0 0.0
    %212 = vmatprep.subr.mxu0 0.0
    %213 = vmatpush2.msra.mxu0 0.0
    %214 = vmatprep.subr.mxu0 0.0
    %215 = vmatpush2.msra.mxu0 0.0
    %216 = vmatprep.subr.mxu0 0.0
    %217 = vmatpush2.msra.mxu0 0.0
    %218 = vmatprep.subr.mxu0 0.0
    %219 = vmatpush2.msra.mxu0 0.0
    %220 = vmatprep.subr.mxu0 0.0
    %221 = vmatpush2.msra.mxu0 0.0
    %222 = vmatprep.subr.mxu0 0.0
    %223 = vmatpush2.msra.mxu0 0.0
    %224 = vmatprep.subr.mxu0 0.0
    %225 = vmatpush2.msra.mxu0 0.0
    %226 = vmatprep.subr.mxu0 0.0
    %227 = vmatpush2.msra.mxu0 0.0
    %228 = vmatprep.subr.mxu0 0.0
    %229 = vmatpush2.msra.mxu0 0.0
    %230 = vmatprep.subr.mxu0 0.0
    %231 = vmatpush2.msra.mxu0 0.0
    %232 = vmatprep.subr.mxu0 0.0
    %233 = vmatpush2.msra.mxu0 0.0
    %234 = vmatprep.subr.mxu0 0.0
    %235 = vmatpush2.msra.mxu0 0.0
    %236 = vmatprep.subr.mxu0 0.0
    %237 = vmatpush2.msra.mxu0 0.0
    %238 = vmatprep.mubr.f32.mxu0 0.0
    %239 = vmatmul.mubr.f32.gmra.mxu0 %v172
    %v240 = vpop.f32.mrf.mxu0
    %v241 = vadd.f32 0.0, %v240
    %v242 = vpop.f32.mrf.mxu0
    %243 = vdwg.mxu0
    %244 = vst.msk [vmem:[#allocation8] sm:$0xff] %vm59, %v241
    %vm245 = vcmask 7168
    %246 = vst.msk [vmem:[#allocation9] sm:$0xff] %vm245, %v167
    %v247 = vld [vmem:[#allocation2] sm:$0xff]
    %s248 = scalar_lea.vmem [#allocation5], 16
    %v249 = vld [vmem:[%s248] sm:$0xff]
    %v250 = vld [vmem:[%s248 + $0x8] sm:$0xff]
    %v251 = vld [vmem:[#allocation7 + $0x1] sm:$0x1]
    %253 = vrot.lane.b32.xlu0 %v247, 96
    %v254 = vpop.permute.xlu0 %253
    %v255 = vsel %vm59, %v254, 0
    %v258 = vsel %vm59, %v249, 0
    %v261 = vsel %vm59, %v250, 0
    %263 = vmatprep.subr.mxu0 0.0
    %264 = vmatpush1.xpose.msra.mxu0 0.0
    %265 = vmatprep.subr.mxu0 0.0
    %266 = vmatpush1.xpose.msra.mxu0 0.0
    %267 = vmatprep.subr.mxu0 0.0
    %268 = vmatpush1.xpose.msra.mxu0 0.0
    %269 = vmatprep.subr.mxu0 0.0
    %270 = vmatpush1.xpose.msra.mxu0 0.0
    %271 = vmatprep.subr.mxu0 0.0
    %272 = vmatpush1.xpose.msra.mxu0 0.0
    %273 = vmatprep.subr.mxu0 0.0
    %274 = vmatpush1.xpose.msra.mxu0 0.0
    %275 = vmatprep.subr.mxu0 0.0
    %276 = vmatpush1.xpose.msra.mxu0 0.0
    %277 = vmatprep.subr.mxu0 0.0
    %278 = vmatpush1.xpose.msra.mxu0 0.0
    %279 = vmatprep.subr.mxu0 0.0
    %280 = vmatpush1.xpose.msra.mxu0 0.0
    %281 = vmatprep.subr.mxu0 0.0
    %282 = vmatpush1.xpose.msra.mxu0 0.0
    %283 = vmatprep.subr.mxu0 0.0
    %284 = vmatpush1.xpose.msra.mxu0 0.0
    %285 = vmatprep.subr.mxu0 0.0
    %286 = vmatpush1.xpose.msra.mxu0 0.0
    %287 = vmatprep.subr.mxu0 0.0
    %288 = vmatpush1.xpose.msra.mxu0 0.0
    %289 = vmatprep.subr.mxu0 0.0
    %290 = vmatpush1.xpose.msra.mxu0 0.0
    %291 = vmatprep.subr.mxu0 0.0
    %292 = vmatpush1.xpose.msra.mxu0 %v261
    %293 = vmatprep.subr.mxu0 0.0
    %294 = vmatpush1.xpose.msra.mxu0 %v258
    %295 = vmatprep.subr.mxu0 0.0
    %296 = vmatpush2.xpose.msra.mxu0 0.0
    %297 = vmatprep.subr.mxu0 0.0
    %298 = vmatpush2.xpose.msra.mxu0 0.0
    %299 = vmatprep.subr.mxu0 0.0
    %300 = vmatpush2.xpose.msra.mxu0 0.0
    %301 = vmatprep.subr.mxu0 0.0
    %302 = vmatpush2.xpose.msra.mxu0 0.0
    %303 = vmatprep.subr.mxu0 0.0
    %304 = vmatpush2.xpose.msra.mxu0 0.0
    %305 = vmatprep.subr.mxu0 0.0
    %306 = vmatpush2.xpose.msra.mxu0 0.0
    %307 = vmatprep.subr.mxu0 0.0
    %308 = vmatpush2.xpose.msra.mxu0 0.0
    %309 = vmatprep.subr.mxu0 0.0
    %310 = vmatpush2.xpose.msra.mxu0 0.0
    %311 = vmatprep.subr.mxu0 0.0
    %312 = vmatpush2.xpose.msra.mxu0 0.0
    %313 = vmatprep.subr.mxu0 0.0
    %314 = vmatpush2.xpose.msra.mxu0 0.0
    %315 = vmatprep.subr.mxu0 0.0
    %316 = vmatpush2.xpose.msra.mxu0 0.0
    %317 = vmatprep.subr.mxu0 0.0
    %318 = vmatpush2.xpose.msra.mxu0 0.0
    %319 = vmatprep.subr.mxu0 0.0
    %320 = vmatpush2.xpose.msra.mxu0 0.0
    %321 = vmatprep.subr.mxu0 0.0
    %322 = vmatpush2.xpose.msra.mxu0 0.0
    %323 = vmatprep.subr.mxu0 0.0
    %324 = vmatpush2.xpose.msra.mxu0 0.0
    %325 = vmatprep.subr.mxu0 0.0
    %326 = vmatpush2.xpose.msra.mxu0 0.0
    %327 = vmatprep.mubr.f32.mxu0 0.0
    %328 = vmatmul.mubr.f32.gmra.mxu0 %v255
    %v329 = vpop.f32.mrf.mxu0
    %v330 = vadd.f32 0.0, %v329
    %v331 = vpop.f32.mrf.mxu0
    %332 = vdwg.mxu0
    %v333 = vmul.f32 %v330, 2.0
    %v334 = vlaneseq
    %v335 = vshrl.u32 %v334, 7
    %v336 = vsub.s32 0, %v335
    %v337 = vrot.slane %v251, %v336
    %v338 = vsub.f32 %v337, %v333
    %v339 = vsel %vm147, %v338, inf
    %340 = vmin.xlane.f32.xlu0 %v339
    %v341 = vpop.xlane.xlu0 %340
    %vm342 = vcmp.le.f32.partialorder %v338, %v341
    %v343 = vsel %vm342, %v146, 16
    %v344 = vsel %vm147, %v343, 2147483647
    %v345 = vand.u32 %v344, 65535
    %v346 = vshra.s32 %v344, 16
    %v347 = vcvt.s32.f32 %v345
    %v348 = vcvt.s32.f32 %v346
    %349 = vmin.xlane.f32.xlu0 %v348
    %v350 = vpop.xlane.xlu0 %349
    %vm351 = vcmp.eq.f32.partialorder %v348, %v350
    %v352 = vsel %vm351, %v347, inf
    %353 = vmin.xlane.f32.xlu0 %v352
    %v354 = vpop.xlane.xlu0 %353
    %v355 = vcvt.f32.s32 %v354
    %v356 = vcvt.f32.s32 %v350
    %v357 = vshll.u32 %v356, 16
    %v358 = vadd.s32 %v357, %v355
    %vm359 = vcmp.eq.s32.totalorder %v146, %v358
    %v360 = vsel %vm359, 1, 0
    %v361 = vcvt.s32.f32 %v360
    %v363 = vsel %vm147, %v361, 0
    %365 = vmatprep.subr.mxu0 0.0
    %366 = vmatpush1.msra.mxu0 0.0
    %367 = vmatprep.subr.mxu0 0.0
    %368 = vmatpush1.msra.mxu0 0.0
    %369 = vmatprep.subr.mxu0 0.0
    %370 = vmatpush1.msra.mxu0 0.0
    %371 = vmatprep.subr.mxu0 0.0
    %372 = vmatpush1.msra.mxu0 0.0
    %373 = vmatprep.subr.mxu0 0.0
    %374 = vmatpush1.msra.mxu0 0.0
    %375 = vmatprep.subr.mxu0 0.0
    %376 = vmatpush1.msra.mxu0 0.0
    %377 = vmatprep.subr.mxu0 0.0
    %378 = vmatpush1.msra.mxu0 0.0
    %379 = vmatprep.subr.mxu0 0.0
    %380 = vmatpush1.msra.mxu0 0.0
    %381 = vmatprep.subr.mxu0 0.0
    %382 = vmatpush1.msra.mxu0 0.0
    %383 = vmatprep.subr.mxu0 0.0
    %384 = vmatpush1.msra.mxu0 0.0
    %385 = vmatprep.subr.mxu0 0.0
    %386 = vmatpush1.msra.mxu0 0.0
    %387 = vmatprep.subr.mxu0 0.0
    %388 = vmatpush1.msra.mxu0 0.0
    %389 = vmatprep.subr.mxu0 0.0
    %390 = vmatpush1.msra.mxu0 0.0
    %391 = vmatprep.subr.mxu0 0.0
    %392 = vmatpush1.msra.mxu0 0.0
    %393 = vmatprep.subr.mxu0 0.0
    %394 = vmatpush1.msra.mxu0 %v250
    %395 = vmatprep.subr.mxu0 0.0
    %396 = vmatpush1.msra.mxu0 %v249
    %397 = vmatprep.subr.mxu0 0.0
    %398 = vmatpush2.msra.mxu0 0.0
    %399 = vmatprep.subr.mxu0 0.0
    %400 = vmatpush2.msra.mxu0 0.0
    %401 = vmatprep.subr.mxu0 0.0
    %402 = vmatpush2.msra.mxu0 0.0
    %403 = vmatprep.subr.mxu0 0.0
    %404 = vmatpush2.msra.mxu0 0.0
    %405 = vmatprep.subr.mxu0 0.0
    %406 = vmatpush2.msra.mxu0 0.0
    %407 = vmatprep.subr.mxu0 0.0
    %408 = vmatpush2.msra.mxu0 0.0
    %409 = vmatprep.subr.mxu0 0.0
    %410 = vmatpush2.msra.mxu0 0.0
    %411 = vmatprep.subr.mxu0 0.0
    %412 = vmatpush2.msra.mxu0 0.0
    %413 = vmatprep.subr.mxu0 0.0
    %414 = vmatpush2.msra.mxu0 0.0
    %415 = vmatprep.subr.mxu0 0.0
    %416 = vmatpush2.msra.mxu0 0.0
    %417 = vmatprep.subr.mxu0 0.0
    %418 = vmatpush2.msra.mxu0 0.0
    %419 = vmatprep.subr.mxu0 0.0
    %420 = vmatpush2.msra.mxu0 0.0
    %421 = vmatprep.subr.mxu0 0.0
    %422 = vmatpush2.msra.mxu0 0.0
    %423 = vmatprep.subr.mxu0 0.0
    %424 = vmatpush2.msra.mxu0 0.0
    %425 = vmatprep.subr.mxu0 0.0
    %426 = vmatpush2.msra.mxu0 0.0
    %427 = vmatprep.subr.mxu0 0.0
    %428 = vmatpush2.msra.mxu0 0.0
    %429 = vmatprep.mubr.f32.mxu0 0.0
    %430 = vmatmul.mubr.f32.gmra.mxu0 %v363
    %v431 = vpop.f32.mrf.mxu0
    %v432 = vadd.f32 0.0, %v431
    %v433 = vpop.f32.mrf.mxu0
    %434 = vdwg.mxu0
    %436 = vrot.lane.b32.xlu0 %v432, 32
    %v437 = vpop.permute.xlu0 %436
    %vm439 = vcmask 523520
    %440 = vst.msk [vmem:[#allocation8] sm:$0xff] %vm439, %v437
    %vm441 = vcmask 15368
    %442 = vst.msk [vmem:[#allocation9] sm:$0xff] %vm441, %v358
    %v443 = vld [vmem:[#allocation2] sm:$0xff]
    %s444 = scalar_lea.vmem [#allocation5], 32
    %v445 = vld [vmem:[%s444] sm:$0xff]
    %v446 = vld [vmem:[%s444 + $0x8] sm:$0xff]
    %v447 = vld [vmem:[#allocation7 + $0x2] sm:$0x1]
    %449 = vrot.lane.b32.xlu0 %v443, 64
    %v450 = vpop.permute.xlu0 %449
    %v451 = vsel %vm59, %v450, 0
    %v454 = vsel %vm59, %v445, 0
    %v457 = vsel %vm59, %v446, 0
    %459 = vmatprep.subr.mxu0 0.0
    %460 = vmatpush1.xpose.msra.mxu0 0.0
    %461 = vmatprep.subr.mxu0 0.0
    %462 = vmatpush1.xpose.msra.mxu0 0.0
    %463 = vmatprep.subr.mxu0 0.0
    %464 = vmatpush1.xpose.msra.mxu0 0.0
    %465 = vmatprep.subr.mxu0 0.0
    %466 = vmatpush1.xpose.msra.mxu0 0.0
    %467 = vmatprep.subr.mxu0 0.0
    %468 = vmatpush1.xpose.msra.mxu0 0.0
    %469 = vmatprep.subr.mxu0 0.0
    %470 = vmatpush1.xpose.msra.mxu0 0.0
    %471 = vmatprep.subr.mxu0 0.0
    %472 = vmatpush1.xpose.msra.mxu0 0.0
    %473 = vmatprep.subr.mxu0 0.0
    %474 = vmatpush1.xpose.msra.mxu0 0.0
    %475 = vmatprep.subr.mxu0 0.0
    %476 = vmatpush1.xpose.msra.mxu0 0.0
    %477 = vmatprep.subr.mxu0 0.0
    %478 = vmatpush1.xpose.msra.mxu0 0.0
    %479 = vmatprep.subr.mxu0 0.0
    %480 = vmatpush1.xpose.msra.mxu0 0.0
    %481 = vmatprep.subr.mxu0 0.0
    %482 = vmatpush1.xpose.msra.mxu0 0.0
    %483 = vmatprep.subr.mxu0 0.0
    %484 = vmatpush1.xpose.msra.mxu0 0.0
    %485 = vmatprep.subr.mxu0 0.0
    %486 = vmatpush1.xpose.msra.mxu0 0.0
    %487 = vmatprep.subr.mxu0 0.0
    %488 = vmatpush1.xpose.msra.mxu0 %v457
    %489 = vmatprep.subr.mxu0 0.0
    %490 = vmatpush1.xpose.msra.mxu0 %v454
    %491 = vmatprep.subr.mxu0 0.0
    %492 = vmatpush2.xpose.msra.mxu0 0.0
    %493 = vmatprep.subr.mxu0 0.0
    %494 = vmatpush2.xpose.msra.mxu0 0.0
    %495 = vmatprep.subr.mxu0 0.0
    %496 = vmatpush2.xpose.msra.mxu0 0.0
    %497 = vmatprep.subr.mxu0 0.0
    %498 = vmatpush2.xpose.msra.mxu0 0.0
    %499 = vmatprep.subr.mxu0 0.0
    %500 = vmatpush2.xpose.msra.mxu0 0.0
    %501 = vmatprep.subr.mxu0 0.0
    %502 = vmatpush2.xpose.msra.mxu0 0.0
    %503 = vmatprep.subr.mxu0 0.0
    %504 = vmatpush2.xpose.msra.mxu0 0.0
    %505 = vmatprep.subr.mxu0 0.0
    %506 = vmatpush2.xpose.msra.mxu0 0.0
    %507 = vmatprep.subr.mxu0 0.0
    %508 = vmatpush2.xpose.msra.mxu0 0.0
    %509 = vmatprep.subr.mxu0 0.0
    %510 = vmatpush2.xpose.msra.mxu0 0.0
    %511 = vmatprep.subr.mxu0 0.0
    %512 = vmatpush2.xpose.msra.mxu0 0.0
    %513 = vmatprep.subr.mxu0 0.0
    %514 = vmatpush2.xpose.msra.mxu0 0.0
    %515 = vmatprep.subr.mxu0 0.0
    %516 = vmatpush2.xpose.msra.mxu0 0.0
    %517 = vmatprep.subr.mxu0 0.0
    %518 = vmatpush2.xpose.msra.mxu0 0.0
    %519 = vmatprep.subr.mxu0 0.0
    %520 = vmatpush2.xpose.msra.mxu0 0.0
    %521 = vmatprep.subr.mxu0 0.0
    %522 = vmatpush2.xpose.msra.mxu0 0.0
    %523 = vmatprep.mubr.f32.mxu0 0.0
    %524 = vmatmul.mubr.f32.gmra.mxu0 %v451
    %v525 = vpop.f32.mrf.mxu0
    %v526 = vadd.f32 0.0, %v525
    %v527 = vpop.f32.mrf.mxu0
    %528 = vdwg.mxu0
    %v529 = vmul.f32 %v526, 2.0
    %v530 = vlaneseq
    %v531 = vshrl.u32 %v530, 7
    %v532 = vsub.s32 0, %v531
    %v533 = vrot.slane %v447, %v532
    %v534 = vsub.f32 %v533, %v529
    %v535 = vsel %vm147, %v534, inf
    %536 = vmin.xlane.f32.xlu0 %v535
    %v537 = vpop.xlane.xlu0 %536
    %vm538 = vcmp.le.f32.partialorder %v534, %v537
    %v539 = vsel %vm538, %v146, 16
    %v540 = vsel %vm147, %v539, 2147483647
    %v541 = vand.u32 %v540, 65535
    %v542 = vshra.s32 %v540, 16
    %v543 = vcvt.s32.f32 %v541
    %v544 = vcvt.s32.f32 %v542
    %545 = vmin.xlane.f32.xlu0 %v544
    %v546 = vpop.xlane.xlu0 %545
    %vm547 = vcmp.eq.f32.partialorder %v544, %v546
    %v548 = vsel %vm547, %v543, inf
    %549 = vmin.xlane.f32.xlu0 %v548
    %v550 = vpop.xlane.xlu0 %549
    %v551 = vcvt.f32.s32 %v550
    %v552 = vcvt.f32.s32 %v546
    %v553 = vshll.u32 %v552, 16
    %v554 = vadd.s32 %v553, %v551
    %vm555 = vcmp.eq.s32.totalorder %v146, %v554
    %v556 = vsel %vm555, 1, 0
    %v557 = vcvt.s32.f32 %v556
    %v559 = vsel %vm147, %v557, 0
    %561 = vmatprep.subr.mxu0 0.0
    %562 = vmatpush1.msra.mxu0 0.0
    %563 = vmatprep.subr.mxu0 0.0
    %564 = vmatpush1.msra.mxu0 0.0
    %565 = vmatprep.subr.mxu0 0.0
    %566 = vmatpush1.msra.mxu0 0.0
    %567 = vmatprep.subr.mxu0 0.0
    %568 = vmatpush1.msra.mxu0 0.0
    %569 = vmatprep.subr.mxu0 0.0
    %570 = vmatpush1.msra.mxu0 0.0
    %571 = vmatprep.subr.mxu0 0.0
    %572 = vmatpush1.msra.mxu0 0.0
    %573 = vmatprep.subr.mxu0 0.0
    %574 = vmatpush1.msra.mxu0 0.0
    %575 = vmatprep.subr.mxu0 0.0
    %576 = vmatpush1.msra.mxu0 0.0
    %577 = vmatprep.subr.mxu0 0.0
    %578 = vmatpush1.msra.mxu0 0.0
    %579 = vmatprep.subr.mxu0 0.0
    %580 = vmatpush1.msra.mxu0 0.0
    %581 = vmatprep.subr.mxu0 0.0
    %582 = vmatpush1.msra.mxu0 0.0
    %583 = vmatprep.subr.mxu0 0.0
    %584 = vmatpush1.msra.mxu0 0.0
    %585 = vmatprep.subr.mxu0 0.0
    %586 = vmatpush1.msra.mxu0 0.0
    %587 = vmatprep.subr.mxu0 0.0
    %588 = vmatpush1.msra.mxu0 0.0
    %589 = vmatprep.subr.mxu0 0.0
    %590 = vmatpush1.msra.mxu0 %v446
    %591 = vmatprep.subr.mxu0 0.0
    %592 = vmatpush1.msra.mxu0 %v445
    %593 = vmatprep.subr.mxu0 0.0
    %594 = vmatpush2.msra.mxu0 0.0
    %595 = vmatprep.subr.mxu0 0.0
    %596 = vmatpush2.msra.mxu0 0.0
    %597 = vmatprep.subr.mxu0 0.0
    %598 = vmatpush2.msra.mxu0 0.0
    %599 = vmatprep.subr.mxu0 0.0
    %600 = vmatpush2.msra.mxu0 0.0
    %601 = vmatprep.subr.mxu0 0.0
    %602 = vmatpush2.msra.mxu0 0.0
    %603 = vmatprep.subr.mxu0 0.0
    %604 = vmatpush2.msra.mxu0 0.0
    %605 = vmatprep.subr.mxu0 0.0
    %606 = vmatpush2.msra.mxu0 0.0
    %607 = vmatprep.subr.mxu0 0.0
    %608 = vmatpush2.msra.mxu0 0.0
    %609 = vmatprep.subr.mxu0 0.0
    %610 = vmatpush2.msra.mxu0 0.0
    %611 = vmatprep.subr.mxu0 0.0
    %612 = vmatpush2.msra.mxu0 0.0
    %613 = vmatprep.subr.mxu0 0.0
    %614 = vmatpush2.msra.mxu0 0.0
    %615 = vmatprep.subr.mxu0 0.0
    %616 = vmatpush2.msra.mxu0 0.0
    %617 = vmatprep.subr.mxu0 0.0
    %618 = vmatpush2.msra.mxu0 0.0
    %619 = vmatprep.subr.mxu0 0.0
    %620 = vmatpush2.msra.mxu0 0.0
    %621 = vmatprep.subr.mxu0 0.0
    %622 = vmatpush2.msra.mxu0 0.0
    %623 = vmatprep.subr.mxu0 0.0
    %624 = vmatpush2.msra.mxu0 0.0
    %625 = vmatprep.mubr.f32.mxu0 0.0
    %626 = vmatmul.mubr.f32.gmra.mxu0 %v559
    %v627 = vpop.f32.mrf.mxu0
    %v628 = vadd.f32 0.0, %v627
    %v629 = vpop.f32.mrf.mxu0
    %630 = vdwg.mxu0
    %632 = vrot.lane.b32.xlu0 %v628, 64
    %v633 = vpop.permute.xlu0 %632
    %vm635 = vcmask 785920
    %636 = vst.msk [vmem:[#allocation8] sm:$0xff] %vm635, %v633
    %vm637 = vcmask 23568
    %638 = vst.msk [vmem:[#allocation9] sm:$0xff] %vm637, %v554
    %v639 = vld [vmem:[#allocation2] sm:$0xff]
    %s640 = scalar_lea.vmem [#allocation5], 48
    %v641 = vld [vmem:[%s640] sm:$0xff]
    %v642 = vld [vmem:[%s640 + $0x8] sm:$0xff]
    %v643 = vld [vmem:[#allocation7 + $0x3] sm:$0x1]
    %645 = vrot.lane.b32.xlu0 %v639, 32
    %v646 = vpop.permute.xlu0 %645
    %v647 = vsel %vm59, %v646, 0
    %v650 = vsel %vm59, %v641, 0
    %v653 = vsel %vm59, %v642, 0
    %655 = vmatprep.subr.mxu0 0.0
    %656 = vmatpush1.xpose.msra.mxu0 0.0
    %657 = vmatprep.subr.mxu0 0.0
    %658 = vmatpush1.xpose.msra.mxu0 0.0
    %659 = vmatprep.subr.mxu0 0.0
    %660 = vmatpush1.xpose.msra.mxu0 0.0
    %661 = vmatprep.subr.mxu0 0.0
    %662 = vmatpush1.xpose.msra.mxu0 0.0
    %663 = vmatprep.subr.mxu0 0.0
    %664 = vmatpush1.xpose.msra.mxu0 0.0
    %665 = vmatprep.subr.mxu0 0.0
    %666 = vmatpush1.xpose.msra.mxu0 0.0
    %667 = vmatprep.subr.mxu0 0.0
    %668 = vmatpush1.xpose.msra.mxu0 0.0
    %669 = vmatprep.subr.mxu0 0.0
    %670 = vmatpush1.xpose.msra.mxu0 0.0
    %671 = vmatprep.subr.mxu0 0.0
    %672 = vmatpush1.xpose.msra.mxu0 0.0
    %673 = vmatprep.subr.mxu0 0.0
    %674 = vmatpush1.xpose.msra.mxu0 0.0
    %675 = vmatprep.subr.mxu0 0.0
    %676 = vmatpush1.xpose.msra.mxu0 0.0
    %677 = vmatprep.subr.mxu0 0.0
    %678 = vmatpush1.xpose.msra.mxu0 0.0
    %679 = vmatprep.subr.mxu0 0.0
    %680 = vmatpush1.xpose.msra.mxu0 0.0
    %681 = vmatprep.subr.mxu0 0.0
    %682 = vmatpush1.xpose.msra.mxu0 0.0
    %683 = vmatprep.subr.mxu0 0.0
    %684 = vmatpush1.xpose.msra.mxu0 %v653
    %685 = vmatprep.subr.mxu0 0.0
    %686 = vmatpush1.xpose.msra.mxu0 %v650
    %687 = vmatprep.subr.mxu0 0.0
    %688 = vmatpush2.xpose.msra.mxu0 0.0
    %689 = vmatprep.subr.mxu0 0.0
    %690 = vmatpush2.xpose.msra.mxu0 0.0
    %691 = vmatprep.subr.mxu0 0.0
    %692 = vmatpush2.xpose.msra.mxu0 0.0
    %693 = vmatprep.subr.mxu0 0.0
    %694 = vmatpush2.xpose.msra.mxu0 0.0
    %695 = vmatprep.subr.mxu0 0.0
    %696 = vmatpush2.xpose.msra.mxu0 0.0
    %697 = vmatprep.subr.mxu0 0.0
    %698 = vmatpush2.xpose.msra.mxu0 0.0
    %699 = vmatprep.subr.mxu0 0.0
    %700 = vmatpush2.xpose.msra.mxu0 0.0
    %701 = vmatprep.subr.mxu0 0.0
    %702 = vmatpush2.xpose.msra.mxu0 0.0
    %703 = vmatprep.subr.mxu0 0.0
    %704 = vmatpush2.xpose.msra.mxu0 0.0
    %705 = vmatprep.subr.mxu0 0.0
    %706 = vmatpush2.xpose.msra.mxu0 0.0
    %707 = vmatprep.subr.mxu0 0.0
    %708 = vmatpush2.xpose.msra.mxu0 0.0
    %709 = vmatprep.subr.mxu0 0.0
    %710 = vmatpush2.xpose.msra.mxu0 0.0
    %711 = vmatprep.subr.mxu0 0.0
    %712 = vmatpush2.xpose.msra.mxu0 0.0
    %713 = vmatprep.subr.mxu0 0.0
    %714 = vmatpush2.xpose.msra.mxu0 0.0
    %715 = vmatprep.subr.mxu0 0.0
    %716 = vmatpush2.xpose.msra.mxu0 0.0
    %717 = vmatprep.subr.mxu0 0.0
    %718 = vmatpush2.xpose.msra.mxu0 0.0
    %719 = vmatprep.mubr.f32.mxu0 0.0
    %720 = vmatmul.mubr.f32.gmra.mxu0 %v647
    %v721 = vpop.f32.mrf.mxu0
    %v722 = vadd.f32 0.0, %v721
    %v723 = vpop.f32.mrf.mxu0
    %724 = vdwg.mxu0
    %v725 = vmul.f32 %v722, 2.0
    %v726 = vlaneseq
    %v727 = vshrl.u32 %v726, 7
    %v728 = vsub.s32 0, %v727
    %v729 = vrot.slane %v643, %v728
    %v730 = vsub.f32 %v729, %v725
    %v731 = vsel %vm147, %v730, inf
    %732 = vmin.xlane.f32.xlu0 %v731
    %v733 = vpop.xlane.xlu0 %732
    %vm734 = vcmp.le.f32.partialorder %v730, %v733
    %v735 = vsel %vm734, %v146, 16
    %v736 = vsel %vm147, %v735, 2147483647
    %v737 = vand.u32 %v736, 65535
    %v738 = vshra.s32 %v736, 16
    %v739 = vcvt.s32.f32 %v737
    %v740 = vcvt.s32.f32 %v738
    %741 = vmin.xlane.f32.xlu0 %v740
    %v742 = vpop.xlane.xlu0 %741
    %vm743 = vcmp.eq.f32.partialorder %v740, %v742
    %v744 = vsel %vm743, %v739, inf
    %745 = vmin.xlane.f32.xlu0 %v744
    %v746 = vpop.xlane.xlu0 %745
    %v747 = vcvt.f32.s32 %v746
    %v748 = vcvt.f32.s32 %v742
    %v749 = vshll.u32 %v748, 16
    %v750 = vadd.s32 %v749, %v747
    %vm751 = vcmp.eq.s32.totalorder %v146, %v750
    %v752 = vsel %vm751, 1, 0
    %v753 = vcvt.s32.f32 %v752
    %v755 = vsel %vm147, %v753, 0
    %757 = vmatprep.subr.mxu0 0.0
    %758 = vmatpush1.msra.mxu0 0.0
    %759 = vmatprep.subr.mxu0 0.0
    %760 = vmatpush1.msra.mxu0 0.0
    %761 = vmatprep.subr.mxu0 0.0
    %762 = vmatpush1.msra.mxu0 0.0
    %763 = vmatprep.subr.mxu0 0.0
    %764 = vmatpush1.msra.mxu0 0.0
    %765 = vmatprep.subr.mxu0 0.0
    %766 = vmatpush1.msra.mxu0 0.0
    %767 = vmatprep.subr.mxu0 0.0
    %768 = vmatpush1.msra.mxu0 0.0
    %769 = vmatprep.subr.mxu0 0.0
    %770 = vmatpush1.msra.mxu0 0.0
    %771 = vmatprep.subr.mxu0 0.0
    %772 = vmatpush1.msra.mxu0 0.0
    %773 = vmatprep.subr.mxu0 0.0
    %774 = vmatpush1.msra.mxu0 0.0
    %775 = vmatprep.subr.mxu0 0.0
    %776 = vmatpush1.msra.mxu0 0.0
    %777 = vmatprep.subr.mxu0 0.0
    %778 = vmatpush1.msra.mxu0 0.0
    %779 = vmatprep.subr.mxu0 0.0
    %780 = vmatpush1.msra.mxu0 0.0
    %781 = vmatprep.subr.mxu0 0.0
    %782 = vmatpush1.msra.mxu0 0.0
    %783 = vmatprep.subr.mxu0 0.0
    %784 = vmatpush1.msra.mxu0 0.0
    %785 = vmatprep.subr.mxu0 0.0
    %786 = vmatpush1.msra.mxu0 %v642
    %787 = vmatprep.subr.mxu0 0.0
    %788 = vmatpush1.msra.mxu0 %v641
    %789 = vmatprep.subr.mxu0 0.0
    %790 = vmatpush2.msra.mxu0 0.0
    %791 = vmatprep.subr.mxu0 0.0
    %792 = vmatpush2.msra.mxu0 0.0
    %793 = vmatprep.subr.mxu0 0.0
    %794 = vmatpush2.msra.mxu0 0.0
    %795 = vmatprep.subr.mxu0 0.0
    %796 = vmatpush2.msra.mxu0 0.0
    %797 = vmatprep.subr.mxu0 0.0
    %798 = vmatpush2.msra.mxu0 0.0
    %799 = vmatprep.subr.mxu0 0.0
    %800 = vmatpush2.msra.mxu0 0.0
    %801 = vmatprep.subr.mxu0 0.0
    %802 = vmatpush2.msra.mxu0 0.0
    %803 = vmatprep.subr.mxu0 0.0
    %804 = vmatpush2.msra.mxu0 0.0
    %805 = vmatprep.subr.mxu0 0.0
    %806 = vmatpush2.msra.mxu0 0.0
    %807 = vmatprep.subr.mxu0 0.0
    %808 = vmatpush2.msra.mxu0 0.0
    %809 = vmatprep.subr.mxu0 0.0
    %810 = vmatpush2.msra.mxu0 0.0
    %811 = vmatprep.subr.mxu0 0.0
    %812 = vmatpush2.msra.mxu0 0.0
    %813 = vmatprep.subr.mxu0 0.0
    %814 = vmatpush2.msra.mxu0 0.0
    %815 = vmatprep.subr.mxu0 0.0
    %816 = vmatpush2.msra.mxu0 0.0
    %817 = vmatprep.subr.mxu0 0.0
    %818 = vmatpush2.msra.mxu0 0.0
    %819 = vmatprep.subr.mxu0 0.0
    %820 = vmatpush2.msra.mxu0 0.0
    %821 = vmatprep.mubr.f32.mxu0 0.0
    %822 = vmatmul.mubr.f32.gmra.mxu0 %v755
    %v823 = vpop.f32.mrf.mxu0
    %v824 = vadd.f32 0.0, %v823
    %v825 = vpop.f32.mrf.mxu0
    %826 = vdwg.mxu0
    %828 = vrot.lane.b32.xlu0 %v824, 96
    %v829 = vpop.permute.xlu0 %828
    %vm831 = vcmask 1048320
    %832 = vst.msk [vmem:[#allocation8] sm:$0xff] %vm831, %v829
    %vm833 = vcmask 31768
    %834 = vst.msk [vmem:[#allocation9] sm:$0xff] %vm833, %v750
    %v835 = vld [vmem:[#allocation2 + $0x8] sm:$0xff]
    %s836 = scalar_lea.vmem [#allocation5], 64
    %v837 = vld [vmem:[%s836] sm:$0xff]
    %v838 = vld [vmem:[%s836 + $0x8] sm:$0xff]
    %v839 = vld [vmem:[#allocation7 + $0x4] sm:$0x1]
    %v841 = vsel %vm59, %v835, 0
    %v844 = vsel %vm59, %v837, 0
    %v847 = vsel %vm59, %v838, 0
    %849 = vmatprep.subr.mxu0 0.0
    %850 = vmatpush1.xpose.msra.mxu0 0.0
    %851 = vmatprep.subr.mxu0 0.0
    %852 = vmatpush1.xpose.msra.mxu0 0.0
    %853 = vmatprep.subr.mxu0 0.0
    %854 = vmatpush1.xpose.msra.mxu0 0.0
    %855 = vmatprep.subr.mxu0 0.0
    %856 = vmatpush1.xpose.msra.mxu0 0.0
    %857 = vmatprep.subr.mxu0 0.0
    %858 = vmatpush1.xpose.msra.mxu0 0.0
    %859 = vmatprep.subr.mxu0 0.0
    %860 = vmatpush1.xpose.msra.mxu0 0.0
    %861 = vmatprep.subr.mxu0 0.0
    %862 = vmatpush1.xpose.msra.mxu0 0.0
    %863 = vmatprep.subr.mxu0 0.0
    %864 = vmatpush1.xpose.msra.mxu0 0.0
    %865 = vmatprep.subr.mxu0 0.0
    %866 = vmatpush1.xpose.msra.mxu0 0.0
    %867 = vmatprep.subr.mxu0 0.0
    %868 = vmatpush1.xpose.msra.mxu0 0.0
    %869 = vmatprep.subr.mxu0 0.0
    %870 = vmatpush1.xpose.msra.mxu0 0.0
    %871 = vmatprep.subr.mxu0 0.0
    %872 = vmatpush1.xpose.msra.mxu0 0.0
    %873 = vmatprep.subr.mxu0 0.0
    %874 = vmatpush1.xpose.msra.mxu0 0.0
    %875 = vmatprep.subr.mxu0 0.0
    %876 = vmatpush1.xpose.msra.mxu0 0.0
    %877 = vmatprep.subr.mxu0 0.0
    %878 = vmatpush1.xpose.msra.mxu0 %v847
    %879 = vmatprep.subr.mxu0 0.0
    %880 = vmatpush1.xpose.msra.mxu0 %v844
    %881 = vmatprep.subr.mxu0 0.0
    %882 = vmatpush2.xpose.msra.mxu0 0.0
    %883 = vmatprep.subr.mxu0 0.0
    %884 = vmatpush2.xpose.msra.mxu0 0.0
    %885 = vmatprep.subr.mxu0 0.0
    %886 = vmatpush2.xpose.msra.mxu0 0.0
    %887 = vmatprep.subr.mxu0 0.0
    %888 = vmatpush2.xpose.msra.mxu0 0.0
    %889 = vmatprep.subr.mxu0 0.0
    %890 = vmatpush2.xpose.msra.mxu0 0.0
    %891 = vmatprep.subr.mxu0 0.0
    %892 = vmatpush2.xpose.msra.mxu0 0.0
    %893 = vmatprep.subr.mxu0 0.0
    %894 = vmatpush2.xpose.msra.mxu0 0.0
    %895 = vmatprep.subr.mxu0 0.0
    %896 = vmatpush2.xpose.msra.mxu0 0.0
    %897 = vmatprep.subr.mxu0 0.0
    %898 = vmatpush2.xpose.msra.mxu0 0.0
    %899 = vmatprep.subr.mxu0 0.0
    %900 = vmatpush2.xpose.msra.mxu0 0.0
    %901 = vmatprep.subr.mxu0 0.0
    %902 = vmatpush2.xpose.msra.mxu0 0.0
    %903 = vmatprep.subr.mxu0 0.0
    %904 = vmatpush2.xpose.msra.mxu0 0.0
    %905 = vmatprep.subr.mxu0 0.0
    %906 = vmatpush2.xpose.msra.mxu0 0.0
    %907 = vmatprep.subr.mxu0 0.0
    %908 = vmatpush2.xpose.msra.mxu0 0.0
    %909 = vmatprep.subr.mxu0 0.0
    %910 = vmatpush2.xpose.msra.mxu0 0.0
    %911 = vmatprep.subr.mxu0 0.0
    %912 = vmatpush2.xpose.msra.mxu0 0.0
    %913 = vmatprep.mubr.f32.mxu0 0.0
    %914 = vmatmul.mubr.f32.gmra.mxu0 %v841
    %v915 = vpop.f32.mrf.mxu0
    %v916 = vadd.f32 0.0, %v915
    %v917 = vpop.f32.mrf.mxu0
    %918 = vdwg.mxu0
    %v919 = vmul.f32 %v916, 2.0
    %v920 = vlaneseq
    %v921 = vshrl.u32 %v920, 7
    %v922 = vsub.s32 0, %v921
    %v923 = vrot.slane %v839, %v922
    %v924 = vsub.f32 %v923, %v919
    %v925 = vsel %vm147, %v924, inf
    %926 = vmin.xlane.f32.xlu0 %v925
    %v927 = vpop.xlane.xlu0 %926
    %vm928 = vcmp.le.f32.partialorder %v924, %v927
    %v929 = vsel %vm928, %v146, 16
    %v930 = vsel %vm147, %v929, 2147483647
    %v931 = vand.u32 %v930, 65535
    %v932 = vshra.s32 %v930, 16
    %v933 = vcvt.s32.f32 %v931
    %v934 = vcvt.s32.f32 %v932
    %935 = vmin.xlane.f32.xlu0 %v934
    %v936 = vpop.xlane.xlu0 %935
    %vm937 = vcmp.eq.f32.partialorder %v934, %v936
    %v938 = vsel %vm937, %v933, inf
    %939 = vmin.xlane.f32.xlu0 %v938
    %v940 = vpop.xlane.xlu0 %939
    %v941 = vcvt.f32.s32 %v940
    %v942 = vcvt.f32.s32 %v936
    %v943 = vshll.u32 %v942, 16
    %v944 = vadd.s32 %v943, %v941
    %vm945 = vcmp.eq.s32.totalorder %v146, %v944
    %v946 = vsel %vm945, 1, 0
    %v947 = vcvt.s32.f32 %v946
    %v949 = vsel %vm147, %v947, 0
    %951 = vmatprep.subr.mxu0 0.0
    %952 = vmatpush1.msra.mxu0 0.0
    %953 = vmatprep.subr.mxu0 0.0
    %954 = vmatpush1.msra.mxu0 0.0
    %955 = vmatprep.subr.mxu0 0.0
    %956 = vmatpush1.msra.mxu0 0.0
    %957 = vmatprep.subr.mxu0 0.0
    %958 = vmatpush1.msra.mxu0 0.0
    %959 = vmatprep.subr.mxu0 0.0
    %960 = vmatpush1.msra.mxu0 0.0
    %961 = vmatprep.subr.mxu0 0.0
    %962 = vmatpush1.msra.mxu0 0.0
    %963 = vmatprep.subr.mxu0 0.0
    %964 = vmatpush1.msra.mxu0 0.0
    %965 = vmatprep.subr.mxu0 0.0
    %966 = vmatpush1.msra.mxu0 0.0
    %967 = vmatprep.subr.mxu0 0.0
    %968 = vmatpush1.msra.mxu0 0.0
    %969 = vmatprep.subr.mxu0 0.0
    %970 = vmatpush1.msra.mxu0 0.0
    %971 = vmatprep.subr.mxu0 0.0
    %972 = vmatpush1.msra.mxu0 0.0
    %973 = vmatprep.subr.mxu0 0.0
    %974 = vmatpush1.msra.mxu0 0.0
    %975 = vmatprep.subr.mxu0 0.0
    %976 = vmatpush1.msra.mxu0 0.0
    %977 = vmatprep.subr.mxu0 0.0
    %978 = vmatpush1.msra.mxu0 0.0
    %979 = vmatprep.subr.mxu0 0.0
    %980 = vmatpush1.msra.mxu0 %v838
    %981 = vmatprep.subr.mxu0 0.0
    %982 = vmatpush1.msra.mxu0 %v837
    %983 = vmatprep.subr.mxu0 0.0
    %984 = vmatpush2.msra.mxu0 0.0
    %985 = vmatprep.subr.mxu0 0.0
    %986 = vmatpush2.msra.mxu0 0.0
    %987 = vmatprep.subr.mxu0 0.0
    %988 = vmatpush2.msra.mxu0 0.0
    %989 = vmatprep.subr.mxu0 0.0
    %990 = vmatpush2.msra.mxu0 0.0
    %991 = vmatprep.subr.mxu0 0.0
    %992 = vmatpush2.msra.mxu0 0.0
    %993 = vmatprep.subr.mxu0 0.0
    %994 = vmatpush2.msra.mxu0 0.0
    %995 = vmatprep.subr.mxu0 0.0
    %996 = vmatpush2.msra.mxu0 0.0
    %997 = vmatprep.subr.mxu0 0.0
    %998 = vmatpush2.msra.mxu0 0.0
    %999 = vmatprep.subr.mxu0 0.0
    %1000 = vmatpush2.msra.mxu0 0.0
    %1001 = vmatprep.subr.mxu0 0.0
    %1002 = vmatpush2.msra.mxu0 0.0
    %1003 = vmatprep.subr.mxu0 0.0
    %1004 = vmatpush2.msra.mxu0 0.0
    %1005 = vmatprep.subr.mxu0 0.0
    %1006 = vmatpush2.msra.mxu0 0.0
    %1007 = vmatprep.subr.mxu0 0.0
    %1008 = vmatpush2.msra.mxu0 0.0
    %1009 = vmatprep.subr.mxu0 0.0
    %1010 = vmatpush2.msra.mxu0 0.0
    %1011 = vmatprep.subr.mxu0 0.0
    %1012 = vmatpush2.msra.mxu0 0.0
    %1013 = vmatprep.subr.mxu0 0.0
    %1014 = vmatpush2.msra.mxu0 0.0
    %1015 = vmatprep.mubr.f32.mxu0 0.0
    %1016 = vmatmul.mubr.f32.gmra.mxu0 %v949
    %v1017 = vpop.f32.mrf.mxu0
    %v1018 = vadd.f32 0.0, %v1017
    %v1019 = vpop.f32.mrf.mxu0
    %1020 = vdwg.mxu0
    %1021 = vst.msk [vmem:[#allocation8 + $0x8] sm:$0xff] %vm59, %v1018
    %vm1022 = vcmask 39968
    %1023 = vst.msk [vmem:[#allocation9] sm:$0xff] %vm1022, %v944
    %v1024 = vld [vmem:[#allocation2 + $0x8] sm:$0xff]
    %s1025 = scalar_lea.vmem [#allocation5], 80
    %v1026 = vld [vmem:[%s1025] sm:$0xff]
    %v1027 = vld [vmem:[%s1025 + $0x8] sm:$0xff]
    %v1028 = vld [vmem:[#allocation7 + $0x5] sm:$0x1]
    %1030 = vrot.lane.b32.xlu0 %v1024, 96
    %v1031 = vpop.permute.xlu0 %1030
    %v1032 = vsel %vm59, %v1031, 0
    %v1035 = vsel %vm59, %v1026, 0
    %v1038 = vsel %vm59, %v1027, 0
    %1040 = vmatprep.subr.mxu0 0.0
    %1041 = vmatpush1.xpose.msra.mxu0 0.0
    %1042 = vmatprep.subr.mxu0 0.0
    %1043 = vmatpush1.xpose.msra.mxu0 0.0
    %1044 = vmatprep.subr.mxu0 0.0
    %1045 = vmatpush1.xpose.msra.mxu0 0.0
    %1046 = vmatprep.subr.mxu0 0.0
    %1047 = vmatpush1.xpose.msra.mxu0 0.0
    %1048 = vmatprep.subr.mxu0 0.0
    %1049 = vmatpush1.xpose.msra.mxu0 0.0
    %1050 = vmatprep.subr.mxu0 0.0
    %1051 = vmatpush1.xpose.msra.mxu0 0.0
    %1052 = vmatprep.subr.mxu0 0.0
    %1053 = vmatpush1.xpose.msra.mxu0 0.0
    %1054 = vmatprep.subr.mxu0 0.0
    %1055 = vmatpush1.xpose.msra.mxu0 0.0
    %1056 = vmatprep.subr.mxu0 0.0
    %1057 = vmatpush1.xpose.msra.mxu0 0.0
    %1058 = vmatprep.subr.mxu0 0.0
    %1059 = vmatpush1.xpose.msra.mxu0 0.0
    %1060 = vmatprep.subr.mxu0 0.0
    %1061 = vmatpush1.xpose.msra.mxu0 0.0
    %1062 = vmatprep.subr.mxu0 0.0
    %1063 = vmatpush1.xpose.msra.mxu0 0.0
    %1064 = vmatprep.subr.mxu0 0.0
    %1065 = vmatpush1.xpose.msra.mxu0 0.0
    %1066 = vmatprep.subr.mxu0 0.0
    %1067 = vmatpush1.xpose.msra.mxu0 0.0
    %1068 = vmatprep.subr.mxu0 0.0
    %1069 = vmatpush1.xpose.msra.mxu0 %v1038
    %1070 = vmatprep.subr.mxu0 0.0
    %1071 = vmatpush1.xpose.msra.mxu0 %v1035
    %1072 = vmatprep.subr.mxu0 0.0
    %1073 = vmatpush2.xpose.msra.mxu0 0.0
    %1074 = vmatprep.subr.mxu0 0.0
    %1075 = vmatpush2.xpose.msra.mxu0 0.0
    %1076 = vmatprep.subr.mxu0 0.0
    %1077 = vmatpush2.xpose.msra.mxu0 0.0
    %1078 = vmatprep.subr.mxu0 0.0
    %1079 = vmatpush2.xpose.msra.mxu0 0.0
    %1080 = vmatprep.subr.mxu0 0.0
    %1081 = vmatpush2.xpose.msra.mxu0 0.0
    %1082 = vmatprep.subr.mxu0 0.0
    %1083 = vmatpush2.xpose.msra.mxu0 0.0
    %1084 = vmatprep.subr.mxu0 0.0
    %1085 = vmatpush2.xpose.msra.mxu0 0.0
    %1086 = vmatprep.subr.mxu0 0.0
    %1087 = vmatpush2.xpose.msra.mxu0 0.0
    %1088 = vmatprep.subr.mxu0 0.0
    %1089 = vmatpush2.xpose.msra.mxu0 0.0
    %1090 = vmatprep.subr.mxu0 0.0
    %1091 = vmatpush2.xpose.msra.mxu0 0.0
    %1092 = vmatprep.subr.mxu0 0.0
    %1093 = vmatpush2.xpose.msra.mxu0 0.0
    %1094 = vmatprep.subr.mxu0 0.0
    %1095 = vmatpush2.xpose.msra.mxu0 0.0
    %1096 = vmatprep.subr.mxu0 0.0
    %1097 = vmatpush2.xpose.msra.mxu0 0.0
    %1098 = vmatprep.subr.mxu0 0.0
    %1099 = vmatpush2.xpose.msra.mxu0 0.0
    %1100 = vmatprep.subr.mxu0 0.0
    %1101 = vmatpush2.xpose.msra.mxu0 0.0
    %1102 = vmatprep.subr.mxu0 0.0
    %1103 = vmatpush2.xpose.msra.mxu0 0.0
    %1104 = vmatprep.mubr.f32.mxu0 0.0
    %1105 = vmatmul.mubr.f32.gmra.mxu0 %v1032
    %v1106 = vpop.f32.mrf.mxu0
    %v1107 = vadd.f32 0.0, %v1106
    %v1108 = vpop.f32.mrf.mxu0
    %1109 = vdwg.mxu0
    %v1110 = vmul.f32 %v1107, 2.0
    %v1111 = vlaneseq
    %v1112 = vshrl.u32 %v1111, 7
    %v1113 = vsub.s32 0, %v1112
    %v1114 = vrot.slane %v1028, %v1113
    %v1115 = vsub.f32 %v1114, %v1110
    %v1116 = vsel %vm147, %v1115, inf
    %1117 = vmin.xlane.f32.xlu0 %v1116
    %v1118 = vpop.xlane.xlu0 %1117
    %vm1119 = vcmp.le.f32.partialorder %v1115, %v1118
    %v1120 = vsel %vm1119, %v146, 16
    %v1121 = vsel %vm147, %v1120, 2147483647
    %v1122 = vand.u32 %v1121, 65535
    %v1123 = vshra.s32 %v1121, 16
    %v1124 = vcvt.s32.f32 %v1122
    %v1125 = vcvt.s32.f32 %v1123
    %1126 = vmin.xlane.f32.xlu0 %v1125
    %v1127 = vpop.xlane.xlu0 %1126
    %vm1128 = vcmp.eq.f32.partialorder %v1125, %v1127
    %v1129 = vsel %vm1128, %v1124, inf
    %1130 = vmin.xlane.f32.xlu0 %v1129
    %v1131 = vpop.xlane.xlu0 %1130
    %v1132 = vcvt.f32.s32 %v1131
    %v1133 = vcvt.f32.s32 %v1127
    %v1134 = vshll.u32 %v1133, 16
    %v1135 = vadd.s32 %v1134, %v1132
    %vm1136 = vcmp.eq.s32.totalorder %v146, %v1135
    %v1137 = vsel %vm1136, 1, 0
    %v1138 = vcvt.s32.f32 %v1137
    %v1140 = vsel %vm147, %v1138, 0
    %1142 = vmatprep.subr.mxu0 0.0
    %1143 = vmatpush1.msra.mxu0 0.0
    %1144 = vmatprep.subr.mxu0 0.0
    %1145 = vmatpush1.msra.mxu0 0.0
    %1146 = vmatprep.subr.mxu0 0.0
    %1147 = vmatpush1.msra.mxu0 0.0
    %1148 = vmatprep.subr.mxu0 0.0
    %1149 = vmatpush1.msra.mxu0 0.0
    %1150 = vmatprep.subr.mxu0 0.0
    %1151 = vmatpush1.msra.mxu0 0.0
    %1152 = vmatprep.subr.mxu0 0.0
    %1153 = vmatpush1.msra.mxu0 0.0
    %1154 = vmatprep.subr.mxu0 0.0
    %1155 = vmatpush1.msra.mxu0 0.0
    %1156 = vmatprep.subr.mxu0 0.0
    %1157 = vmatpush1.msra.mxu0 0.0
    %1158 = vmatprep.subr.mxu0 0.0
    %1159 = vmatpush1.msra.mxu0 0.0
    %1160 = vmatprep.subr.mxu0 0.0
    %1161 = vmatpush1.msra.mxu0 0.0
    %1162 = vmatprep.subr.mxu0 0.0
    %1163 = vmatpush1.msra.mxu0 0.0
    %1164 = vmatprep.subr.mxu0 0.0
    %1165 = vmatpush1.msra.mxu0 0.0
    %1166 = vmatprep.subr.mxu0 0.0
    %1167 = vmatpush1.msra.mxu0 0.0
    %1168 = vmatprep.subr.mxu0 0.0
    %1169 = vmatpush1.msra.mxu0 0.0
    %1170 = vmatprep.subr.mxu0 0.0
    %1171 = vmatpush1.msra.mxu0 %v1027
    %1172 = vmatprep.subr.mxu0 0.0
    %1173 = vmatpush1.msra.mxu0 %v1026
    %1174 = vmatprep.subr.mxu0 0.0
    %1175 = vmatpush2.msra.mxu0 0.0
    %1176 = vmatprep.subr.mxu0 0.0
    %1177 = vmatpush2.msra.mxu0 0.0
    %1178 = vmatprep.subr.mxu0 0.0
    %1179 = vmatpush2.msra.mxu0 0.0
    %1180 = vmatprep.subr.mxu0 0.0
    %1181 = vmatpush2.msra.mxu0 0.0
    %1182 = vmatprep.subr.mxu0 0.0
    %1183 = vmatpush2.msra.mxu0 0.0
    %1184 = vmatprep.subr.mxu0 0.0
    %1185 = vmatpush2.msra.mxu0 0.0
    %1186 = vmatprep.subr.mxu0 0.0
    %1187 = vmatpush2.msra.mxu0 0.0
    %1188 = vmatprep.subr.mxu0 0.0
    %1189 = vmatpush2.msra.mxu0 0.0
    %1190 = vmatprep.subr.mxu0 0.0
    %1191 = vmatpush2.msra.mxu0 0.0
    %1192 = vmatprep.subr.mxu0 0.0
    %1193 = vmatpush2.msra.mxu0 0.0
    %1194 = vmatprep.subr.mxu0 0.0
    %1195 = vmatpush2.msra.mxu0 0.0
    %1196 = vmatprep.subr.mxu0 0.0
    %1197 = vmatpush2.msra.mxu0 0.0
    %1198 = vmatprep.subr.mxu0 0.0
    %1199 = vmatpush2.msra.mxu0 0.0
    %1200 = vmatprep.subr.mxu0 0.0
    %1201 = vmatpush2.msra.mxu0 0.0
    %1202 = vmatprep.subr.mxu0 0.0
    %1203 = vmatpush2.msra.mxu0 0.0
    %1204 = vmatprep.subr.mxu0 0.0
    %1205 = vmatpush2.msra.mxu0 0.0
    %1206 = vmatprep.mubr.f32.mxu0 0.0
    %1207 = vmatmul.mubr.f32.gmra.mxu0 %v1140
    %v1208 = vpop.f32.mrf.mxu0
    %v1209 = vadd.f32 0.0, %v1208
    %v1210 = vpop.f32.mrf.mxu0
    %1211 = vdwg.mxu0
    %1213 = vrot.lane.b32.xlu0 %v1209, 32
    %v1214 = vpop.permute.xlu0 %1213
    %1216 = vst.msk [vmem:[#allocation8 + $0x8] sm:$0xff] %vm439, %v1214
    %vm1217 = vcmask 48168
    %1218 = vst.msk [vmem:[#allocation9] sm:$0xff] %vm1217, %v1135
    %v1219 = vld [vmem:[#allocation2 + $0x8] sm:$0xff]
    %s1220 = scalar_lea.vmem [#allocation5], 96
    %v1221 = vld [vmem:[%s1220] sm:$0xff]
    %v1222 = vld [vmem:[%s1220 + $0x8] sm:$0xff]
    %v1223 = vld [vmem:[#allocation7 + $0x6] sm:$0x1]
    %1225 = vrot.lane.b32.xlu0 %v1219, 64
    %v1226 = vpop.permute.xlu0 %1225
    %v1227 = vsel %vm59, %v1226, 0
    %v1230 = vsel %vm59, %v1221, 0
    %v1233 = vsel %vm59, %v1222, 0
    %1235 = vmatprep.subr.mxu0 0.0
    %1236 = vmatpush1.xpose.msra.mxu0 0.0
    %1237 = vmatprep.subr.mxu0 0.0
    %1238 = vmatpush1.xpose.msra.mxu0 0.0
    %1239 = vmatprep.subr.mxu0 0.0
    %1240 = vmatpush1.xpose.msra.mxu0 0.0
    %1241 = vmatprep.subr.mxu0 0.0
    %1242 = vmatpush1.xpose.msra.mxu0 0.0
    %1243 = vmatprep.subr.mxu0 0.0
    %1244 = vmatpush1.xpose.msra.mxu0 0.0
    %1245 = vmatprep.subr.mxu0 0.0
    %1246 = vmatpush1.xpose.msra.mxu0 0.0
    %1247 = vmatprep.subr.mxu0 0.0
    %1248 = vmatpush1.xpose.msra.mxu0 0.0
    %1249 = vmatprep.subr.mxu0 0.0
    %1250 = vmatpush1.xpose.msra.mxu0 0.0
    %1251 = vmatprep.subr.mxu0 0.0
    %1252 = vmatpush1.xpose.msra.mxu0 0.0
    %1253 = vmatprep.subr.mxu0 0.0
    %1254 = vmatpush1.xpose.msra.mxu0 0.0
    %1255 = vmatprep.subr.mxu0 0.0
    %1256 = vmatpush1.xpose.msra.mxu0 0.0
    %1257 = vmatprep.subr.mxu0 0.0
    %1258 = vmatpush1.xpose.msra.mxu0 0.0
    %1259 = vmatprep.subr.mxu0 0.0
    %1260 = vmatpush1.xpose.msra.mxu0 0.0
    %1261 = vmatprep.subr.mxu0 0.0
    %1262 = vmatpush1.xpose.msra.mxu0 0.0
    %1263 = vmatprep.subr.mxu0 0.0
    %1264 = vmatpush1.xpose.msra.mxu0 %v1233
    %1265 = vmatprep.subr.mxu0 0.0
    %1266 = vmatpush1.xpose.msra.mxu0 %v1230
    %1267 = vmatprep.subr.mxu0 0.0
    %1268 = vmatpush2.xpose.msra.mxu0 0.0
    %1269 = vmatprep.subr.mxu0 0.0
    %1270 = vmatpush2.xpose.msra.mxu0 0.0
    %1271 = vmatprep.subr.mxu0 0.0
    %1272 = vmatpush2.xpose.msra.mxu0 0.0
    %1273 = vmatprep.subr.mxu0 0.0
    %1274 = vmatpush2.xpose.msra.mxu0 0.0
    %1275 = vmatprep.subr.mxu0 0.0
    %1276 = vmatpush2.xpose.msra.mxu0 0.0
    %1277 = vmatprep.subr.mxu0 0.0
    %1278 = vmatpush2.xpose.msra.mxu0 0.0
    %1279 = vmatprep.subr.mxu0 0.0
    %1280 = vmatpush2.xpose.msra.mxu0 0.0
    %1281 = vmatprep.subr.mxu0 0.0
    %1282 = vmatpush2.xpose.msra.mxu0 0.0
    %1283 = vmatprep.subr.mxu0 0.0
    %1284 = vmatpush2.xpose.msra.mxu0 0.0
    %1285 = vmatprep.subr.mxu0 0.0
    %1286 = vmatpush2.xpose.msra.mxu0 0.0
    %1287 = vmatprep.subr.mxu0 0.0
    %1288 = vmatpush2.xpose.msra.mxu0 0.0
    %1289 = vmatprep.subr.mxu0 0.0
    %1290 = vmatpush2.xpose.msra.mxu0 0.0
    %1291 = vmatprep.subr.mxu0 0.0
    %1292 = vmatpush2.xpose.msra.mxu0 0.0
    %1293 = vmatprep.subr.mxu0 0.0
    %1294 = vmatpush2.xpose.msra.mxu0 0.0
    %1295 = vmatprep.subr.mxu0 0.0
    %1296 = vmatpush2.xpose.msra.mxu0 0.0
    %1297 = vmatprep.subr.mxu0 0.0
    %1298 = vmatpush2.xpose.msra.mxu0 0.0
    %1299 = vmatprep.mubr.f32.mxu0 0.0
    %1300 = vmatmul.mubr.f32.gmra.mxu0 %v1227
    %v1301 = vpop.f32.mrf.mxu0
    %v1302 = vadd.f32 0.0, %v1301
    %v1303 = vpop.f32.mrf.mxu0
    %1304 = vdwg.mxu0
    %v1305 = vmul.f32 %v1302, 2.0
    %v1306 = vlaneseq
    %v1307 = vshrl.u32 %v1306, 7
    %v1308 = vsub.s32 0, %v1307
    %v1309 = vrot.slane %v1223, %v1308
    %v1310 = vsub.f32 %v1309, %v1305
    %v1311 = vsel %vm147, %v1310, inf
    %1312 = vmin.xlane.f32.xlu0 %v1311
    %v1313 = vpop.xlane.xlu0 %1312
    %vm1314 = vcmp.le.f32.partialorder %v1310, %v1313
    %v1315 = vsel %vm1314, %v146, 16
    %v1316 = vsel %vm147, %v1315, 2147483647
    %v1317 = vand.u32 %v1316, 65535
    %v1318 = vshra.s32 %v1316, 16
    %v1319 = vcvt.s32.f32 %v1317
    %v1320 = vcvt.s32.f32 %v1318
    %1321 = vmin.xlane.f32.xlu0 %v1320
    %v1322 = vpop.xlane.xlu0 %1321
    %vm1323 = vcmp.eq.f32.partialorder %v1320, %v1322
    %v1324 = vsel %vm1323, %v1319, inf
    %1325 = vmin.xlane.f32.xlu0 %v1324
    %v1326 = vpop.xlane.xlu0 %1325
    %v1327 = vcvt.f32.s32 %v1326
    %v1328 = vcvt.f32.s32 %v1322
    %v1329 = vshll.u32 %v1328, 16
    %v1330 = vadd.s32 %v1329, %v1327
    %vm1331 = vcmp.eq.s32.totalorder %v146, %v1330
    %v1332 = vsel %vm1331, 1, 0
    %v1333 = vcvt.s32.f32 %v1332
    %v1335 = vsel %vm147, %v1333, 0
    %1337 = vmatprep.subr.mxu0 0.0
    %1338 = vmatpush1.msra.mxu0 0.0
    %1339 = vmatprep.subr.mxu0 0.0
    %1340 = vmatpush1.msra.mxu0 0.0
    %1341 = vmatprep.subr.mxu0 0.0
    %1342 = vmatpush1.msra.mxu0 0.0
    %1343 = vmatprep.subr.mxu0 0.0
    %1344 = vmatpush1.msra.mxu0 0.0
    %1345 = vmatprep.subr.mxu0 0.0
    %1346 = vmatpush1.msra.mxu0 0.0
    %1347 = vmatprep.subr.mxu0 0.0
    %1348 = vmatpush1.msra.mxu0 0.0
    %1349 = vmatprep.subr.mxu0 0.0
    %1350 = vmatpush1.msra.mxu0 0.0
    %1351 = vmatprep.subr.mxu0 0.0
    %1352 = vmatpush1.msra.mxu0 0.0
    %1353 = vmatprep.subr.mxu0 0.0
    %1354 = vmatpush1.msra.mxu0 0.0
    %1355 = vmatprep.subr.mxu0 0.0
    %1356 = vmatpush1.msra.mxu0 0.0
    %1357 = vmatprep.subr.mxu0 0.0
    %1358 = vmatpush1.msra.mxu0 0.0
    %1359 = vmatprep.subr.mxu0 0.0
    %1360 = vmatpush1.msra.mxu0 0.0
    %1361 = vmatprep.subr.mxu0 0.0
    %1362 = vmatpush1.msra.mxu0 0.0
    %1363 = vmatprep.subr.mxu0 0.0
    %1364 = vmatpush1.msra.mxu0 0.0
    %1365 = vmatprep.subr.mxu0 0.0
    %1366 = vmatpush1.msra.mxu0 %v1222
    %1367 = vmatprep.subr.mxu0 0.0
    %1368 = vmatpush1.msra.mxu0 %v1221
    %1369 = vmatprep.subr.mxu0 0.0
    %1370 = vmatpush2.msra.mxu0 0.0
    %1371 = vmatprep.subr.mxu0 0.0
    %1372 = vmatpush2.msra.mxu0 0.0
    %1373 = vmatprep.subr.mxu0 0.0
    %1374 = vmatpush2.msra.mxu0 0.0
    %1375 = vmatprep.subr.mxu0 0.0
    %1376 = vmatpush2.msra.mxu0 0.0
    %1377 = vmatprep.subr.mxu0 0.0
    %1378 = vmatpush2.msra.mxu0 0.0
    %1379 = vmatprep.subr.mxu0 0.0
    %1380 = vmatpush2.msra.mxu0 0.0
    %1381 = vmatprep.subr.mxu0 0.0
    %1382 = vmatpush2.msra.mxu0 0.0
    %1383 = vmatprep.subr.mxu0 0.0
    %1384 = vmatpush2.msra.mxu0 0.0
    %1385 = vmatprep.subr.mxu0 0.0
    %1386 = vmatpush2.msra.mxu0 0.0
    %1387 = vmatprep.subr.mxu0 0.0
    %1388 = vmatpush2.msra.mxu0 0.0
    %1389 = vmatprep.subr.mxu0 0.0
    %1390 = vmatpush2.msra.mxu0 0.0
    %1391 = vmatprep.subr.mxu0 0.0
    %1392 = vmatpush2.msra.mxu0 0.0
    %1393 = vmatprep.subr.mxu0 0.0
    %1394 = vmatpush2.msra.mxu0 0.0
    %1395 = vmatprep.subr.mxu0 0.0
    %1396 = vmatpush2.msra.mxu0 0.0
    %1397 = vmatprep.subr.mxu0 0.0
    %1398 = vmatpush2.msra.mxu0 0.0
    %1399 = vmatprep.subr.mxu0 0.0
    %1400 = vmatpush2.msra.mxu0 0.0
    %1401 = vmatprep.mubr.f32.mxu0 0.0
    %1402 = vmatmul.mubr.f32.gmra.mxu0 %v1335
    %v1403 = vpop.f32.mrf.mxu0
    %v1404 = vadd.f32 0.0, %v1403
    %v1405 = vpop.f32.mrf.mxu0
    %1406 = vdwg.mxu0
    %1408 = vrot.lane.b32.xlu0 %v1404, 64
    %v1409 = vpop.permute.xlu0 %1408
    %1411 = vst.msk [vmem:[#allocation8 + $0x8] sm:$0xff] %vm635, %v1409
    %vm1412 = vcmask 56368
    %1413 = vst.msk [vmem:[#allocation9] sm:$0xff] %vm1412, %v1330
    %v1414 = vld [vmem:[#allocation2 + $0x8] sm:$0xff]
    %s1415 = scalar_lea.vmem [#allocation5], 112
    %v1416 = vld [vmem:[%s1415] sm:$0xff]
    %v1417 = vld [vmem:[%s1415 + $0x8] sm:$0xff]
    %v1418 = vld [vmem:[#allocation7 + $0x7] sm:$0x1]
    %1420 = vrot.lane.b32.xlu0 %v1414, 32
    %v1421 = vpop.permute.xlu0 %1420
    %v1422 = vsel %vm59, %v1421, 0
    %v1425 = vsel %vm59, %v1416, 0
    %v1428 = vsel %vm59, %v1417, 0
    %1430 = vmatprep.subr.mxu0 0.0
    %1431 = vmatpush1.xpose.msra.mxu0 0.0
    %1432 = vmatprep.subr.mxu0 0.0
    %1433 = vmatpush1.xpose.msra.mxu0 0.0
    %1434 = vmatprep.subr.mxu0 0.0
    %1435 = vmatpush1.xpose.msra.mxu0 0.0
    %1436 = vmatprep.subr.mxu0 0.0
    %1437 = vmatpush1.xpose.msra.mxu0 0.0
    %1438 = vmatprep.subr.mxu0 0.0
    %1439 = vmatpush1.xpose.msra.mxu0 0.0
    %1440 = vmatprep.subr.mxu0 0.0
    %1441 = vmatpush1.xpose.msra.mxu0 0.0
    %1442 = vmatprep.subr.mxu0 0.0
    %1443 = vmatpush1.xpose.msra.mxu0 0.0
    %1444 = vmatprep.subr.mxu0 0.0
    %1445 = vmatpush1.xpose.msra.mxu0 0.0
    %1446 = vmatprep.subr.mxu0 0.0
    %1447 = vmatpush1.xpose.msra.mxu0 0.0
    %1448 = vmatprep.subr.mxu0 0.0
    %1449 = vmatpush1.xpose.msra.mxu0 0.0
    %1450 = vmatprep.subr.mxu0 0.0
    %1451 = vmatpush1.xpose.msra.mxu0 0.0
    %1452 = vmatprep.subr.mxu0 0.0
    %1453 = vmatpush1.xpose.msra.mxu0 0.0
    %1454 = vmatprep.subr.mxu0 0.0
    %1455 = vmatpush1.xpose.msra.mxu0 0.0
    %1456 = vmatprep.subr.mxu0 0.0
    %1457 = vmatpush1.xpose.msra.mxu0 0.0
    %1458 = vmatprep.subr.mxu0 0.0
    %1459 = vmatpush1.xpose.msra.mxu0 %v1428
    %1460 = vmatprep.subr.mxu0 0.0
    %1461 = vmatpush1.xpose.msra.mxu0 %v1425
    %1462 = vmatprep.subr.mxu0 0.0
    %1463 = vmatpush2.xpose.msra.mxu0 0.0
    %1464 = vmatprep.subr.mxu0 0.0
    %1465 = vmatpush2.xpose.msra.mxu0 0.0
    %1466 = vmatprep.subr.mxu0 0.0
    %1467 = vmatpush2.xpose.msra.mxu0 0.0
    %1468 = vmatprep.subr.mxu0 0.0
    %1469 = vmatpush2.xpose.msra.mxu0 0.0
    %1470 = vmatprep.subr.mxu0 0.0
    %1471 = vmatpush2.xpose.msra.mxu0 0.0
    %1472 = vmatprep.subr.mxu0 0.0
    %1473 = vmatpush2.xpose.msra.mxu0 0.0
    %1474 = vmatprep.subr.mxu0 0.0
    %1475 = vmatpush2.xpose.msra.mxu0 0.0
    %1476 = vmatprep.subr.mxu0 0.0
    %1477 = vmatpush2.xpose.msra.mxu0 0.0
    %1478 = vmatprep.subr.mxu0 0.0
    %1479 = vmatpush2.xpose.msra.mxu0 0.0
    %1480 = vmatprep.subr.mxu0 0.0
    %1481 = vmatpush2.xpose.msra.mxu0 0.0
    %1482 = vmatprep.subr.mxu0 0.0
    %1483 = vmatpush2.xpose.msra.mxu0 0.0
    %1484 = vmatprep.subr.mxu0 0.0
    %1485 = vmatpush2.xpose.msra.mxu0 0.0
    %1486 = vmatprep.subr.mxu0 0.0
    %1487 = vmatpush2.xpose.msra.mxu0 0.0
    %1488 = vmatprep.subr.mxu0 0.0
    %1489 = vmatpush2.xpose.msra.mxu0 0.0
    %1490 = vmatprep.subr.mxu0 0.0
    %1491 = vmatpush2.xpose.msra.mxu0 0.0
    %1492 = vmatprep.subr.mxu0 0.0
    %1493 = vmatpush2.xpose.msra.mxu0 0.0
    %1494 = vmatprep.mubr.f32.mxu0 0.0
    %1495 = vmatmul.mubr.f32.gmra.mxu0 %v1422
    %v1496 = vpop.f32.mrf.mxu0
    %v1497 = vadd.f32 0.0, %v1496
    %v1498 = vpop.f32.mrf.mxu0
    %1499 = vdwg.mxu0
    %v1500 = vmul.f32 %v1497, 2.0
    %v1501 = vlaneseq
    %v1502 = vshrl.u32 %v1501, 7
    %v1503 = vsub.s32 0, %v1502
    %v1504 = vrot.slane %v1418, %v1503
    %v1505 = vsub.f32 %v1504, %v1500
    %v1506 = vsel %vm147, %v1505, inf
    %1507 = vmin.xlane.f32.xlu0 %v1506
    %v1508 = vpop.xlane.xlu0 %1507
    %vm1509 = vcmp.le.f32.partialorder %v1505, %v1508
    %v1510 = vsel %vm1509, %v146, 16
    %v1511 = vsel %vm147, %v1510, 2147483647
    %v1512 = vand.u32 %v1511, 65535
    %v1513 = vshra.s32 %v1511, 16
    %v1514 = vcvt.s32.f32 %v1512
    %v1515 = vcvt.s32.f32 %v1513
    %1516 = vmin.xlane.f32.xlu0 %v1515
    %v1517 = vpop.xlane.xlu0 %1516
    %vm1518 = vcmp.eq.f32.partialorder %v1515, %v1517
    %v1519 = vsel %vm1518, %v1514, inf
    %1520 = vmin.xlane.f32.xlu0 %v1519
    %v1521 = vpop.xlane.xlu0 %1520
    %v1522 = vcvt.f32.s32 %v1521
    %v1523 = vcvt.f32.s32 %v1517
    %v1524 = vshll.u32 %v1523, 16
    %v1525 = vadd.s32 %v1524, %v1522
    %vm1526 = vcmp.eq.s32.totalorder %v146, %v1525
    %v1527 = vsel %vm1526, 1, 0
    %v1528 = vcvt.s32.f32 %v1527
    %v1530 = vsel %vm147, %v1528, 0
    %1532 = vmatprep.subr.mxu0 0.0
    %1533 = vmatpush1.msra.mxu0 0.0
    %1534 = vmatprep.subr.mxu0 0.0
    %1535 = vmatpush1.msra.mxu0 0.0
    %1536 = vmatprep.subr.mxu0 0.0
    %1537 = vmatpush1.msra.mxu0 0.0
    %1538 = vmatprep.subr.mxu0 0.0
    %1539 = vmatpush1.msra.mxu0 0.0
    %1540 = vmatprep.subr.mxu0 0.0
    %1541 = vmatpush1.msra.mxu0 0.0
    %1542 = vmatprep.subr.mxu0 0.0
    %1543 = vmatpush1.msra.mxu0 0.0
    %1544 = vmatprep.subr.mxu0 0.0
    %1545 = vmatpush1.msra.mxu0 0.0
    %1546 = vmatprep.subr.mxu0 0.0
    %1547 = vmatpush1.msra.mxu0 0.0
    %1548 = vmatprep.subr.mxu0 0.0
    %1549 = vmatpush1.msra.mxu0 0.0
    %1550 = vmatprep.subr.mxu0 0.0
    %1551 = vmatpush1.msra.mxu0 0.0
    %1552 = vmatprep.subr.mxu0 0.0
    %1553 = vmatpush1.msra.mxu0 0.0
    %1554 = vmatprep.subr.mxu0 0.0
    %1555 = vmatpush1.msra.mxu0 0.0
    %1556 = vmatprep.subr.mxu0 0.0
    %1557 = vmatpush1.msra.mxu0 0.0
    %1558 = vmatprep.subr.mxu0 0.0
    %1559 = vmatpush1.msra.mxu0 0.0
    %1560 = vmatprep.subr.mxu0 0.0
    %1561 = vmatpush1.msra.mxu0 %v1417
    %1562 = vmatprep.subr.mxu0 0.0
    %1563 = vmatpush1.msra.mxu0 %v1416
    %1564 = vmatprep.subr.mxu0 0.0
    %1565 = vmatpush2.msra.mxu0 0.0
    %1566 = vmatprep.subr.mxu0 0.0
    %1567 = vmatpush2.msra.mxu0 0.0
    %1568 = vmatprep.subr.mxu0 0.0
    %1569 = vmatpush2.msra.mxu0 0.0
    %1570 = vmatprep.subr.mxu0 0.0
    %1571 = vmatpush2.msra.mxu0 0.0
    %1572 = vmatprep.subr.mxu0 0.0
    %1573 = vmatpush2.msra.mxu0 0.0
    %1574 = vmatprep.subr.mxu0 0.0
    %1575 = vmatpush2.msra.mxu0 0.0
    %1576 = vmatprep.subr.mxu0 0.0
    %1577 = vmatpush2.msra.mxu0 0.0
    %1578 = vmatprep.subr.mxu0 0.0
    %1579 = vmatpush2.msra.mxu0 0.0
    %1580 = vmatprep.subr.mxu0 0.0
    %1581 = vmatpush2.msra.mxu0 0.0
    %1582 = vmatprep.subr.mxu0 0.0
    %1583 = vmatpush2.msra.mxu0 0.0
    %1584 = vmatprep.subr.mxu0 0.0
    %1585 = vmatpush2.msra.mxu0 0.0
    %1586 = vmatprep.subr.mxu0 0.0
    %1587 = vmatpush2.msra.mxu0 0.0
    %1588 = vmatprep.subr.mxu0 0.0
    %1589 = vmatpush2.msra.mxu0 0.0
    %1590 = vmatprep.subr.mxu0 0.0
    %1591 = vmatpush2.msra.mxu0 0.0
    %1592 = vmatprep.subr.mxu0 0.0
    %1593 = vmatpush2.msra.mxu0 0.0
    %1594 = vmatprep.subr.mxu0 0.0
    %1595 = vmatpush2.msra.mxu0 0.0
    %1596 = vmatprep.mubr.f32.mxu0 0.0
    %1597 = vmatmul.mubr.f32.gmra.mxu0 %v1530
    %v1598 = vpop.f32.mrf.mxu0
    %v1599 = vadd.f32 0.0, %v1598
    %v1600 = vpop.f32.mrf.mxu0
    %1601 = vdwg.mxu0
    %1603 = vrot.lane.b32.xlu0 %v1599, 96
    %v1604 = vpop.permute.xlu0 %1603
    %1606 = vst.msk [vmem:[#allocation8 + $0x8] sm:$0xff] %vm831, %v1604
    %vm1607 = vcmask 64568
    %1608 = vst.msk [vmem:[#allocation9] sm:$0xff] %vm1607, %v1525
    // Predicated region
    $region26: #{tpu_custom_call.1} parent=1 // pred_check
      _
    $region27: #{tpu_custom_call.1} parent=1 // pred_check_branch
      %1610 = sbr.rel (0) target = $region29
    $region28: #{tpu_custom_call.1} parent=1 // pred_region
      %s1612 = ssub.s32 256, 256
      %1613 = vsyncadd [#allocation4], %s1612
      %s1615 = sshll.u32 [#allocation8], 4
      %s1616 = int_to_ptr.vmem [resolvable:$true] %s1615
      %1618 = dma.vmem_to_hbm [thread:$0]  %s1616, 256, %s3, [#allocation4]
    $region29: #{tpu_custom_call.1} parent=1 // pred_fallthru
      _
    // Predicated region
    $region30: #{tpu_custom_call.1} parent=1 // pred_check
      _
    $region31: #{tpu_custom_call.1} parent=1 // pred_check_branch
      %1620 = sbr.rel (0) target = $region33
    $region32: #{tpu_custom_call.1} parent=1 // pred_region
      %s1622 = ssub.s32 128, 128
      %1623 = vsyncadd [#allocation10], %s1622
      %s1625 = sshll.u32 [#allocation9], 4
      %s1626 = int_to_ptr.vmem [resolvable:$true] %s1625
      %1628 = dma.vmem_to_hbm [thread:$0]  %s1626, 128, %s4, [#allocation10]
    $region33: #{tpu_custom_call.1} parent=1 // pred_fallthru
      _
    // Predicated region
    $region34: #{tpu_custom_call.1} parent=1 // pred_check
      _
    $region35: #{tpu_custom_call.1} parent=1 // pred_check_branch
      %1630 = sbr.rel (0) target = $region37
    $region36: #{tpu_custom_call.1} parent=1 // pred_region
      %1631 = dma.done [#allocation4], 256
    $region37: #{tpu_custom_call.1} parent=1 // pred_fallthru
      _
    // Predicated region
    $region38: #{tpu_custom_call.1} parent=1 // pred_check
      _
    $region39: #{tpu_custom_call.1} parent=1 // pred_check_branch
      %1633 = sbr.rel (0) target = $region41
    $region40: #{tpu_custom_call.1} parent=1 // pred_region
      %1634 = dma.done [#allocation10], 128
    $region41: #{tpu_custom_call.1} parent=1 // pred_fallthru
      _
    %1635 = vsyncpa [#allocation3], 1
    %1636 = vsyncpa [#allocation6], 1
    %1637 = vsyncpa [#allocation4], 1
    %1638 = vsyncpa [#allocation10], 1

</llo_original>
